<compile_context>
chip_gen: v7x
topology: tpu7x:2x2x1
jax: 0.10.0
libtpu: 0.0.40
codegen_flags: <defaults>
</compile_context>

<pallas_src>
import functools

import jax
import jax.numpy as jnp
from jax.experimental import pallas as pl
from jax.experimental.pallas import tpu as pltpu

LN_EPS = 1e-5
NEG_INF = -1e30  # large finite negative: avoids NaN if a row were fully masked


def _layernorm(x, gamma, beta):
    # PyTorch nn.LayerNorm semantics: biased variance over last dim, eps=1e-5.
    mean = jnp.mean(x, axis=-1, keepdims=True)
    var = jnp.mean((x - mean) ** 2, axis=-1, keepdims=True)
    return (x - mean) * jax.lax.rsqrt(var + LN_EPS) * gamma + beta


def _vmem_limit_bytes():
    # Per-generation scoped-VMEM budget: ~3/4 of physical, capped at 100 MiB.
    try:
        cap = pltpu.get_tpu_info().vmem_capacity_bytes
    except Exception:
        cap = 64 * 1024 * 1024
    return int(min(cap * 3 // 4, 100 * 1024 * 1024))


def _pick_batch_block(B):
    for cand in (8, 4, 2, 1):
        if B % cand == 0:
            return cand
    return 1


def _pick_tile(n, prefs):
    for t in prefs:
        if n > t and n % t == 0:
            return t
    return n


# --------------------------------------------------------------------------
# Fused transformer-blocks kernel: grid = (batch_block, layer)
# --------------------------------------------------------------------------
def _blocks_kernel(x_ref, mask_ref, ln1g_ref, ln1b_ref, wqkv_ref, wo_ref,
                   bo_ref, ln2g_ref, ln2b_ref, w1_ref, b1_ref, w2_ref, b2_ref,
                   lnfg_ref, lnfb_ref, y_ref, attn_ref, x_acc, *, num_heads):
    l = pl.program_id(1)
    n_layers = pl.num_programs(1)

    Bb, T, C = x_ref.shape
    H = num_heads
    hs = C // H
    bf16 = jnp.bfloat16

    # Load the residual stream from HBM only once (layer 0); it stays resident
    # in VMEM scratch across the whole (innermost, "arbitrary") layer axis.
    @pl.when(l == 0)
    def _():
        x_acc[...] = x_ref[...].reshape(Bb * T, C)

    x = x_acc[...]                                             # (Bb*T, C) f32

    # ---- multi-head causal self-attention on LN1(x) -----------------------
    h = _layernorm(x, ln1g_ref[...], ln1b_ref[...]).astype(bf16)
    # fused q/k/v projection (scale already folded into the q columns of wqkv)
    qkv = jnp.dot(h, wqkv_ref[...],
                  preferred_element_type=jnp.float32)          # (Bb*T, 3C)

    def split_heads(z):                                        # -> (Bb*H, T, hs)
        return z.reshape(Bb, T, H, hs).swapaxes(1, 2).reshape(Bb * H, T, hs)

    qh = split_heads(qkv[:, :C]).astype(bf16)
    kh = split_heads(qkv[:, C:2 * C]).astype(bf16)
    vh = split_heads(qkv[:, 2 * C:]).astype(bf16)

    s = jnp.einsum('zqd,zkd->zqk', qh, kh,
                   preferred_element_type=jnp.float32)         # (Bb*H, T, T)
    s = s + mask_ref[...][None, :, :]                          # additive causal

    m = jnp.max(s, axis=-1, keepdims=True)
    e = jnp.exp(s - m)
    denom = jnp.sum(e, axis=-1, keepdims=True)
    p = e * pl.reciprocal(denom, approx=True)                  # softmax probs
    attn_ref[...] = p.reshape(Bb, H, T, T).astype(attn_ref.dtype)   # bf16 write

    o = jnp.einsum('zqk,zkd->zqd', p.astype(bf16), vh,
                   preferred_element_type=jnp.float32)         # (Bb*H, T, hs)
    o = o.reshape(Bb, H, T, hs).swapaxes(1, 2).reshape(Bb * T, C)
    o = jnp.dot(o.astype(bf16), wo_ref[...],
                preferred_element_type=jnp.float32) + bo_ref[...]
    x = x + o                                                  # residual 1

    # ---- feed-forward on LN2(x) -------------------------------------------
    h2 = _layernorm(x, ln2g_ref[...], ln2b_ref[...]).astype(bf16)
    f = jnp.dot(h2, w1_ref[...], preferred_element_type=jnp.float32) + b1_ref[...]
    f = jnp.maximum(f, 0.0).astype(bf16)                       # ReLU
    f = jnp.dot(f, w2_ref[...], preferred_element_type=jnp.float32) + b2_ref[...]
    x = x + f                                                  # residual 2

    x_acc[...] = x

    # Epilogue: apply the final LayerNorm here (hoisted out of the vocab-tiled
    # lm_head) and emit the stream in bf16.
    @pl.when(l == n_layers - 1)
    def _():
        yf = _layernorm(x, lnfg_ref[...], lnfb_ref[...])
        y_ref[...] = yf.reshape(Bb, T, C).astype(y_ref.dtype)


def transformer_blocks(x, p, num_heads):
    B, T, C = x.shape
    L = p['wqkv'].shape[0]
    F = p['w1'].shape[-1]
    Bb = _pick_batch_block(B)
    nB = B // Bb

    # Causal additive mask computed once on host side; constant index_map means
    # it is DMA'd into VMEM once and elided thereafter.
    row = jax.lax.broadcasted_iota(jnp.int32, (T, T), 0)
    col = jax.lax.broadcasted_iota(jnp.int32, (T, T), 1)
    mask = jnp.where(row >= col, 0.0, NEG_INF).astype(jnp.float32)

    args = (x, mask,
            p['ln1_g'], p['ln1_b'], p['wqkv'], p['wo'], p['bo'],
            p['ln2_g'], p['ln2_b'], p['w1'], p['b1'], p['w2'], p['b2'],
            p['lnf_g'], p['lnf_b'])

    x_map = lambda b, l: (b, 0, 0)          # varies over batch-block, not layer
    layer_map = lambda b, l: (l, 0, 0)      # per-layer weight slab
    const2 = lambda b, l: (0, 0)

    in_specs = [
        pl.BlockSpec((Bb, T, C), x_map),
        pl.BlockSpec((T, T), const2),              # causal mask
        pl.BlockSpec((None, 1, C), layer_map),     # ln1_g
        pl.BlockSpec((None, 1, C), layer_map),     # ln1_b
        pl.BlockSpec((None, C, 3 * C), layer_map),  # wqkv (fused, scale folded)
        pl.BlockSpec((None, C, C), layer_map),     # wo
        pl.BlockSpec((None, 1, C), layer_map),     # bo
        pl.BlockSpec((None, 1, C), layer_map),     # ln2_g
        pl.BlockSpec((None, 1, C), layer_map),     # ln2_b
        pl.BlockSpec((None, C, F), layer_map),     # w1
        pl.BlockSpec((None, 1, F), layer_map),     # b1
        pl.BlockSpec((None, F, C), layer_map),     # w2
        pl.BlockSpec((None, 1, C), layer_map),     # b2
        pl.BlockSpec((1, C), const2),              # lnf_g
        pl.BlockSpec((1, C), const2),              # lnf_b
    ]
    out_specs = (
        pl.BlockSpec((Bb, T, C), lambda b, l: (b, 0, 0)),
        pl.BlockSpec((None, Bb, num_heads, T, T), lambda b, l: (l, b, 0, 0, 0)),
    )
    out_shape = (
        jax.ShapeDtypeStruct((B, T, C), jnp.bfloat16),                # LN_f(x)
        jax.ShapeDtypeStruct((L, B, num_heads, T, T), jnp.bfloat16),  # attn maps
    )

    y, attn = pl.pallas_call(
        functools.partial(_blocks_kernel, num_heads=num_heads),
        out_shape=out_shape,
        grid_spec=pltpu.PrefetchScalarGridSpec(
            num_scalar_prefetch=0,
            grid=(nB, L),
            in_specs=in_specs,
            out_specs=out_specs,
            scratch_shapes=[pltpu.VMEM((Bb * T, C), jnp.float32)]),
        compiler_params=pltpu.CompilerParams(
            dimension_semantics=("parallel", "arbitrary"),
            vmem_limit_bytes=_vmem_limit_bytes()),
    )(*args)
    return y, attn


# --------------------------------------------------------------------------
# lm_head: pure MXU matmul (final LN already applied in the blocks kernel)
# --------------------------------------------------------------------------
def _head_kernel(x_ref, w_ref, bias_ref, out_ref):
    out_ref[...] = (jnp.dot(x_ref[...], w_ref[...],
                            preferred_element_type=jnp.float32) + bias_ref[...])


def lm_head(y, w, bias):
    B, T, C = y.shape
    V = w.shape[-1]
    M = B * T
    y2 = y.reshape(M, C)

    TM = _pick_tile(M, (512, 256, 128))
    TV = _pick_tile(V, (2048, 1024, 512, 256, 128))
    nM, nV = M // TM, V // TV

    # Pick the grid ordering that minimizes total HBM read traffic:
    #   rows-outer (vocab inner): x read once, (C,V) weights re-read nM times
    #   vocab-outer (rows inner): weights read once, x re-read nV times
    rows_outer_bytes = M * C * 2 + nM * C * V * 2
    vocab_outer_bytes = C * V * 2 + nV * M * C * 2
    if rows_outer_bytes <= vocab_outer_bytes:
        grid = (nM, nV)
        x_map = lambda i, j: (i, 0)
        w_map = lambda i, j: (0, j)
        b_map = lambda i, j: (0, j)
        o_map = lambda i, j: (i, j)
    else:
        grid = (nV, nM)
        x_map = lambda j, i: (i, 0)
        w_map = lambda j, i: (0, j)
        b_map = lambda j, i: (0, j)
        o_map = lambda j, i: (i, j)

    out = pl.pallas_call(
        _head_kernel,
        out_shape=jax.ShapeDtypeStruct((M, V), jnp.float32),
        grid_spec=pltpu.PrefetchScalarGridSpec(
            num_scalar_prefetch=0,
            grid=grid,
            in_specs=[
                pl.BlockSpec((TM, C), x_map),
                pl.BlockSpec((C, TV), w_map),
                pl.BlockSpec((1, TV), b_map),
            ],
            out_specs=pl.BlockSpec((TM, TV), o_map)),
        compiler_params=pltpu.CompilerParams(
            dimension_semantics=("parallel", "parallel"),
            vmem_limit_bytes=_vmem_limit_bytes()),
    )(y2, w, bias)
    return out.reshape(B, T, V)


# --------------------------------------------------------------------------
# One-time parameter preparation (weight fusion / bf16 cast / scale folding)
# --------------------------------------------------------------------------
def prepare_params(p, num_heads):
    bf16 = jnp.bfloat16
    C = p['wq'].shape[-1]
    hs = C // num_heads
    scale = jnp.float32(1.0 / (hs ** 0.5))
    return {
        'tok_emb': p['tok_emb'],
        'pos_emb': p['pos_emb'],
        'ln1_g': p['ln1_g'], 'ln1_b': p['ln1_b'],
        # fold 1/sqrt(hs) into wq, fuse q/k/v into one (L, C, 3C) slab
        'wqkv': jnp.concatenate([p['wq'] * scale, p['wk'], p['wv']],
                                axis=-1).astype(bf16),
        'wo': p['wo'].astype(bf16), 'bo': p['bo'],
        'ln2_g': p['ln2_g'], 'ln2_b': p['ln2_b'],
        'w1': p['w1'].astype(bf16), 'b1': p['b1'],
        'w2': p['w2'].astype(bf16), 'b2': p['b2'],
        'lnf_g': p['lnf_g'], 'lnf_b': p['lnf_b'],
        'w_head': p['w_head'].astype(bf16), 'b_head': p['b_head'],
    }


# --------------------------------------------------------------------------
# Full forward (mirrors DecoderModel.forward)
# --------------------------------------------------------------------------
def decoder_forward(params, idx, *, num_heads, apply_alibi=False, targets=None):
    B, T = idx.shape
    # Embedding gather is glue (data-dependent row lookup), kept outside Pallas.
    tok_emb = jnp.take(params['tok_emb'], idx, axis=0)            # (B, T, C)
    if not apply_alibi:
        x = tok_emb + params['pos_emb'][:T][None, :, :]
    else:
        x = tok_emb  # TODO(synk): ALiBi bias path not implemented for this config.

    y, attn_all = transformer_blocks(x, params, num_heads)
    attn_maps = [attn_all[l] for l in range(attn_all.shape[0])]

    logits = lm_head(y, params['w_head'], params['b_head'])       # (B, T, V)

    loss = None
    if targets is not None:
        # TODO(synk): fuse cross-entropy into the vocab-tiled lm_head kernel.
        V = logits.shape[-1]
        lg = logits.reshape(-1, V)
        tg = targets.reshape(-1)
        logz = jax.nn.logsumexp(lg, axis=-1)
        loss = jnp.mean(logz - jnp.take_along_axis(lg, tg[:, None], axis=-1)[:, 0])
    return logits, loss, attn_maps


# --------------------------------------------------------------------------
# Parameter init (per-layer weights stacked along a leading layer axis)
# --------------------------------------------------------------------------
def init_params(key, vocab_size, n_embd, block_size, num_heads, num_layers):
    C, F, L = n_embd, 4 * n_embd, num_layers
    ks = jax.random.split(key, 9)

    def lin(k, shape):
        return jax.random.normal(k, shape, jnp.float32) * 0.02

    return {
        'tok_emb': lin(ks[0], (vocab_size, C)),
        'pos_emb': lin(ks[1], (block_size, C)),
        'lnf_g': jnp.ones((1, C), jnp.float32),
        'lnf_b': jnp.zeros((1, C), jnp.float32),
        'w_head': lin(ks[2], (C, vocab_size)),
        'b_head': jnp.zeros((1, vocab_size), jnp.float32),
        'ln1_g': jnp.ones((L, 1, C), jnp.float32),
        'ln1_b': jnp.zeros((L, 1, C), jnp.float32),
        'wq': lin(ks[3], (L, C, C)),
        'wk': lin(ks[4], (L, C, C)),
        'wv': lin(ks[5], (L, C, C)),
        'wo': lin(ks[6], (L, C, C)),
        'bo': jnp.zeros((L, 1, C), jnp.float32),
        'ln2_g': jnp.ones((L, 1, C), jnp.float32),
        'ln2_b': jnp.zeros((L, 1, C), jnp.float32),
        'w1': lin(ks[7], (L, C, F)),
        'b1': jnp.zeros((L, 1, F), jnp.float32),
        'w2': lin(ks[8], (L, F, C)),
        'b2': jnp.zeros((L, 1, C), jnp.float32),
    }


# --------------------------------------------------------------------------
# Pure-JAX f32 reference (for correctness checking)
# --------------------------------------------------------------------------
def _reference_forward(params, idx, num_heads):
    B, T = idx.shape
    x = jnp.take(params['tok_emb'], idx, axis=0) + params['pos_emb'][:T][None]
    C = x.shape[-1]
    hs = C // num_heads
    L = params['wq'].shape[0]
    mask = jnp.tril(jnp.ones((T, T), bool))
    attn_maps = []
    for l in range(L):
        h = _layernorm(x, params['ln1_g'][l], params['ln1_b'][l])
        q = h @ params['wq'][l]
        k = h @ params['wk'][l]
        v = h @ params['wv'][l]
        qh = q.reshape(B, T, num_heads, hs).transpose(0, 2, 1, 3)
        kh = k.reshape(B, T, num_heads, hs).transpose(0, 2, 1, 3)
        vh = v.reshape(B, T, num_heads, hs).transpose(0, 2, 1, 3)
        s = jnp.einsum('bhqd,bhkd->bhqk', qh, kh) * (hs ** -0.5)
        s = jnp.where(mask, s, NEG_INF)
        p = jax.nn.softmax(s, axis=-1)
        attn_maps.append(p)
        o = jnp.einsum('bhqk,bhkd->bhqd', p, vh).transpose(0, 2, 1, 3)
        o = o.reshape(B, T, C) @ params['wo'][l] + params['bo'][l]
        x = x + o
        h2 = _layernorm(x, params['ln2_g'][l], params['ln2_b'][l])
        f = jnp.maximum(h2 @ params['w1'][l] + params['b1'][l], 0.0)
        x = x + f @ params['w2'][l] + params['b2'][l]
    hf = _layernorm(x, params['lnf_g'], params['lnf_b'])
    logits = hf @ params['w_head'] + params['b_head']
    return logits, attn_maps


if __name__ == "__main__":
    vocab_size, n_embd, block_size = 64, 32, 8
    num_heads, num_layers = 2, 2
    B, T = 2, 8

    key = jax.random.PRNGKey(0)
    pkey, dkey, tkey = jax.random.split(key, 3)
    params = init_params(pkey, vocab_size, n_embd, block_size, num_heads, num_layers)
    idx = jax.random.randint(dkey, (B, T), 0, vocab_size, dtype=jnp.int32)

    prepared = prepare_params(params, num_heads)
    logits, loss, attn_maps = decoder_forward(prepared, idx, num_heads=num_heads,
                                              apply_alibi=False, targets=None)
    jax.block_until_ready(logits)
    for a in attn_maps:
        jax.block_until_ready(a)

    assert logits.shape == (B, T, vocab_size)
    assert loss is None
    assert len(attn_maps) == num_layers
    assert attn_maps[0].shape == (B, num_heads, T, T)
    # softmax rows sum to ~1 (bf16 maps + approx reciprocal -> small slack)
    row_sums = jnp.sum(attn_maps[0].astype(jnp.float32), axis=-1)
    assert bool(jnp.allclose(row_sums, 1.0, atol=2e-2))

    # compare against pure-JAX f32 reference (bf16 MXU math -> loose tolerance)
    ref_logits, ref_attn = _reference_forward(params, idx, num_heads)
    assert bool(jnp.allclose(logits, ref_logits, atol=3e-2, rtol=3e-2))
    for l in range(num_layers):
        assert bool(jnp.allclose(attn_maps[l].astype(jnp.float32), ref_attn[l],
                                 atol=2e-2, rtol=2e-2))

    # exercise the targets / loss path
    targets = jax.random.randint(tkey, (B, T), 0, vocab_size, dtype=jnp.int32)
    _, loss2, _ = decoder_forward(prepared, idx, num_heads=num_heads, targets=targets)
    jax.block_until_ready(loss2)
    assert loss2 is not None and bool(jnp.isfinite(loss2))

    print("KERNEL_OK")
</pallas_src>

<mosaic_0001>
module attributes {stable_mosaic.version = 11 : i64} {
  func.func @_blocks_kernel(%arg0: i32, %arg1: i32, %arg2: memref<2x8x32xf32, #tpu.memory_space<vmem>>, %arg3: memref<8x8xf32, #tpu.memory_space<vmem>>, %arg4: memref<1x1x32xf32, #tpu.memory_space<vmem>>, %arg5: memref<1x1x32xf32, #tpu.memory_space<vmem>>, %arg6: memref<1x32x96xbf16, #tpu.memory_space<vmem>>, %arg7: memref<1x32x32xbf16, #tpu.memory_space<vmem>>, %arg8: memref<1x1x32xf32, #tpu.memory_space<vmem>>, %arg9: memref<1x1x32xf32, #tpu.memory_space<vmem>>, %arg10: memref<1x1x32xf32, #tpu.memory_space<vmem>>, %arg11: memref<1x32x128xbf16, #tpu.memory_space<vmem>>, %arg12: memref<1x1x128xf32, #tpu.memory_space<vmem>>, %arg13: memref<1x128x32xbf16, #tpu.memory_space<vmem>>, %arg14: memref<1x1x32xf32, #tpu.memory_space<vmem>>, %arg15: memref<1x32xf32, #tpu.memory_space<vmem>>, %arg16: memref<1x32xf32, #tpu.memory_space<vmem>>, %arg17: memref<2x8x32xbf16, #tpu.memory_space<vmem>>, %arg18: memref<1x2x2x8x8xbf16, #tpu.memory_space<vmem>>, %arg19: memref<16x32xf32, #tpu.memory_space<vmem>>) attributes {dimension_semantics = [#tpu.dimension_semantics<parallel>, #tpu.dimension_semantics<arbitrary>], iteration_bounds = array<i64: 1, 2>, scalar_prefetch = 0 : i64, scratch_operands = 1 : i64, tpu.core_type = #tpu.core_type<tc>, window_params = [{transform_indices = @transform_0, window_bounds = array<i64: 2, 8, 32>}, {pipeline_mode = #tpu.pipeline_mode<synchronous>, transform_indices = @transform_1, window_bounds = array<i64: 8, 8>}, {transform_indices = @transform_2, window_bounds = array<i64: 1, 1, 32>}, {transform_indices = @transform_3, window_bounds = array<i64: 1, 1, 32>}, {transform_indices = @transform_4, window_bounds = array<i64: 1, 32, 96>}, {transform_indices = @transform_5, window_bounds = array<i64: 1, 32, 32>}, {transform_indices = @transform_6, window_bounds = array<i64: 1, 1, 32>}, {transform_indices = @transform_7, window_bounds = array<i64: 1, 1, 32>}, {transform_indices = @transform_8, window_bounds = array<i64: 1, 1, 32>}, {transform_indices = @transform_9, window_bounds = array<i64: 1, 32, 128>}, {transform_indices = @transform_10, window_bounds = array<i64: 1, 1, 128>}, {transform_indices = @transform_11, window_bounds = array<i64: 1, 128, 32>}, {transform_indices = @transform_12, window_bounds = array<i64: 1, 1, 32>}, {pipeline_mode = #tpu.pipeline_mode<synchronous>, transform_indices = @transform_13, window_bounds = array<i64: 1, 32>}, {pipeline_mode = #tpu.pipeline_mode<synchronous>, transform_indices = @transform_14, window_bounds = array<i64: 1, 32>}, {transform_indices = @transform_15, window_bounds = array<i64: 2, 8, 32>}, {transform_indices = @transform_16, window_bounds = array<i64: 1, 2, 2, 8, 8>}]} {
    %c0_i32 = arith.constant 0 : i32
    %0 = arith.cmpi eq, %arg1, %c0_i32 : i32
    %1 = arith.extui %0 : i1 to i32
    %c0_i32_0 = arith.constant 0 : i32
    %2 = arith.cmpi ne, %1, %c0_i32_0 : i32
    scf.if %2 {
      %c0_63 = arith.constant 0 : index
      %c0_64 = arith.constant 0 : index
      %c0_65 = arith.constant 0 : index
      %132 = vector.load %arg2[%c0_63, %c0_64, %c0_65] : memref<2x8x32xf32, #tpu.memory_space<vmem>>, vector<2x8x32xf32>
      %133 = vector.shape_cast %132 : vector<2x8x32xf32> to vector<16x32xf32>
      %c0_66 = arith.constant 0 : index
      %c0_67 = arith.constant 0 : index
      %134 = vector.load %arg19[%c0_66, %c0_67] : memref<16x32xf32, #tpu.memory_space<vmem>>, vector<16x32xf32>
      tpu.vector_store %arg19[%c0_66, %c0_67], %133 {strides = array<i32>} : memref<16x32xf32, #tpu.memory_space<vmem>>, vector<16x32xf32>,
    } else {
    }
    %c0 = arith.constant 0 : index
    %c0_1 = arith.constant 0 : index
    %3 = vector.load %arg19[%c0, %c0_1] : memref<16x32xf32, #tpu.memory_space<vmem>>, vector<16x32xf32>
    %c0_2 = arith.constant 0 : index
    %c0_3 = arith.constant 0 : index
    %c0_4 = arith.constant 0 : index
    %4 = vector.load %arg4[%c0_2, %c0_3, %c0_4] : memref<1x1x32xf32, #tpu.memory_space<vmem>>, vector<1x1x32xf32>
    %5 = vector.shape_cast %4 : vector<1x1x32xf32> to vector<1x32xf32>
    %c0_5 = arith.constant 0 : index
    %c0_6 = arith.constant 0 : index
    %c0_7 = arith.constant 0 : index
    %6 = vector.load %arg5[%c0_5, %c0_6, %c0_7] : memref<1x1x32xf32, #tpu.memory_space<vmem>>, vector<1x1x32xf32>
    %7 = vector.shape_cast %6 : vector<1x1x32xf32> to vector<1x32xf32>
    %cst = arith.constant dense<0.000000e+00> : vector<16xf32>
    %8 = vector.multi_reduction <add>, %3, %cst [1] : vector<16x32xf32> to vector<16xf32>
    %9 = vector.shape_cast %8 : vector<16xf32> to vector<16x1xf32>
    %cst_8 = arith.constant 3.200000e+01 : f32
    %10 = vector.broadcast %cst_8 : f32 to vector<16x1xf32>
    %11 = arith.divf %9, %10 : vector<16x1xf32>
    %12 = vector.broadcast %11 : vector<16x1xf32> to vector<16x32xf32>
    %13 = arith.subf %3, %12 : vector<16x32xf32>
    %14 = arith.mulf %13, %13 : vector<16x32xf32>
    %cst_9 = arith.constant dense<0.000000e+00> : vector<16xf32>
    %15 = vector.multi_reduction <add>, %14, %cst_9 [1] : vector<16x32xf32> to vector<16xf32>
    %16 = vector.shape_cast %15 : vector<16xf32> to vector<16x1xf32>
    %cst_10 = arith.constant 3.200000e+01 : f32
    %17 = vector.broadcast %cst_10 : f32 to vector<16x1xf32>
    %18 = arith.divf %16, %17 : vector<16x1xf32>
    %19 = vector.broadcast %11 : vector<16x1xf32> to vector<16x32xf32>
    %20 = arith.subf %3, %19 : vector<16x32xf32>
    %cst_11 = arith.constant 9.99999974E-6 : f32
    %21 = vector.broadcast %cst_11 : f32 to vector<16x1xf32>
    %22 = arith.addf %18, %21 : vector<16x1xf32>
    %23 = math.rsqrt %22 : vector<16x1xf32>
    %24 = vector.broadcast %23 : vector<16x1xf32> to vector<16x32xf32>
    %25 = arith.mulf %20, %24 : vector<16x32xf32>
    %26 = vector.broadcast %5 : vector<1x32xf32> to vector<16x32xf32>
    %27 = arith.mulf %25, %26 : vector<16x32xf32>
    %28 = vector.broadcast %7 : vector<1x32xf32> to vector<16x32xf32>
    %29 = arith.addf %27, %28 : vector<16x32xf32>
    %30 = arith.truncf %29 : vector<16x32xf32> to vector<16x32xbf16>
    %c0_12 = arith.constant 0 : index
    %c0_13 = arith.constant 0 : index
    %c0_14 = arith.constant 0 : index
    %31 = vector.load %arg6[%c0_12, %c0_13, %c0_14] : memref<1x32x96xbf16, #tpu.memory_space<vmem>>, vector<1x32x96xbf16>
    %32 = vector.shape_cast %31 : vector<1x32x96xbf16> to vector<32x96xbf16>
    %cst_15 = arith.constant dense<0.000000e+00> : vector<16x96xf32>
    %33 = tpu.matmul %30, %32, %cst_15 {dimension_numbers = #tpu.dot_dimension_numbers<[1], [0], [0], [1], [0, 0, 1, 1], [], []>} : vector<16x32xbf16>, vector<32x96xbf16>, vector<16x96xf32> -> vector<16x96xf32>
    %34 = vector.extract_strided_slice %33 {offsets = [0, 0], sizes = [16, 32], strides = [1, 1]} : vector<16x96xf32> to vector<16x32xf32>
    %35 = vector.shape_cast %34 : vector<16x32xf32> to vector<2x8x2x16xf32>
    %36 = tpu.transpose %35, [0, 2, 1, 3] : vector<2x8x2x16xf32> -> vector<2x2x8x16xf32>
    %37 = vector.shape_cast %36 : vector<2x2x8x16xf32> to vector<4x8x16xf32>
    %38 = arith.truncf %37 : vector<4x8x16xf32> to vector<4x8x16xbf16>
    %39 = vector.extract_strided_slice %33 {offsets = [0, 32], sizes = [16, 32], strides = [1, 1]} : vector<16x96xf32> to vector<16x32xf32>
    %40 = vector.shape_cast %39 : vector<16x32xf32> to vector<2x8x2x16xf32>
    %41 = tpu.transpose %40, [0, 2, 1, 3] : vector<2x8x2x16xf32> -> vector<2x2x8x16xf32>
    %42 = vector.shape_cast %41 : vector<2x2x8x16xf32> to vector<4x8x16xf32>
    %43 = arith.truncf %42 : vector<4x8x16xf32> to vector<4x8x16xbf16>
    %44 = vector.extract_strided_slice %33 {offsets = [0, 64], sizes = [16, 32], strides = [1, 1]} : vector<16x96xf32> to vector<16x32xf32>
    %45 = vector.shape_cast %44 : vector<16x32xf32> to vector<2x8x2x16xf32>
    %46 = tpu.transpose %45, [0, 2, 1, 3] : vector<2x8x2x16xf32> -> vector<2x2x8x16xf32>
    %47 = vector.shape_cast %46 : vector<2x2x8x16xf32> to vector<4x8x16xf32>
    %48 = arith.truncf %47 : vector<4x8x16xf32> to vector<4x8x16xbf16>
    "tpu.trace_start"() <{level = 10 : i32, message = "zqd,zkd->zqk"}> : () -> ()
    %cst_16 = arith.constant dense<0.000000e+00> : vector<4x8x8xf32>
    %49 = tpu.matmul %38, %43, %cst_16 {dimension_numbers = #tpu.dot_dimension_numbers<[2], [2], [1], [1], [0, 0, 0, 1, 1, 1], [0], [0]>} : vector<4x8x16xbf16>, vector<4x8x16xbf16>, vector<4x8x8xf32> -> vector<4x8x8xf32>
    "tpu.trace_stop"() : () -> ()
    %c0_17 = arith.constant 0 : index
    %c0_18 = arith.constant 0 : index
    %50 = vector.load %arg3[%c0_17, %c0_18] : memref<8x8xf32, #tpu.memory_space<vmem>>, vector<8x8xf32>
    %51 = vector.shape_cast %50 : vector<8x8xf32> to vector<1x8x8xf32>
    %52 = vector.broadcast %51 : vector<1x8x8xf32> to vector<4x8x8xf32>
    %53 = arith.addf %49, %52 : vector<4x8x8xf32>
    %cst_19 = arith.constant dense<0xFF800000> : vector<4x8xf32>
    %54 = vector.multi_reduction <maximumf>, %53, %cst_19 [2] : vector<4x8x8xf32> to vector<4x8xf32>
    %55 = vector.shape_cast %54 : vector<4x8xf32> to vector<4x8x1xf32>
    %56 = vector.broadcast %55 : vector<4x8x1xf32> to vector<4x8x8xf32>
    %57 = arith.subf %53, %56 : vector<4x8x8xf32>
    %58 = math.exp %57 : vector<4x8x8xf32>
    %cst_20 = arith.constant dense<0.000000e+00> : vector<4x8xf32>
    %59 = vector.multi_reduction <add>, %58, %cst_20 [2] : vector<4x8x8xf32> to vector<4x8xf32>
    %60 = vector.shape_cast %59 : vector<4x8xf32> to vector<4x8x1xf32>
    %61 = tpu.reciprocal %60 {approx = true} : vector<4x8x1xf32> -> vector<4x8x1xf32>
    %62 = vector.broadcast %61 : vector<4x8x1xf32> to vector<4x8x8xf32>
    %63 = arith.mulf %58, %62 : vector<4x8x8xf32>
    %64 = vector.shape_cast %63 : vector<4x8x8xf32> to vector<2x2x8x8xf32>
    %65 = arith.truncf %64 : vector<2x2x8x8xf32> to vector<2x2x8x8xbf16>
    %c0_21 = arith.constant 0 : index
    %c0_22 = arith.constant 0 : index
    %c0_23 = arith.constant 0 : index
    %c0_24 = arith.constant 0 : index
    %c0_25 = arith.constant 0 : index
    %66 = vector.load %arg18[%c0_21, %c0_22, %c0_23, %c0_24, %c0_25] : memref<1x2x2x8x8xbf16, #tpu.memory_space<vmem>>, vector<1x2x2x8x8xbf16>
    %67 = vector.shape_cast %66 : vector<1x2x2x8x8xbf16> to vector<2x2x8x8xbf16>
    %68 = vector.shape_cast %65 : vector<2x2x8x8xbf16> to vector<1x2x2x8x8xbf16>
    tpu.vector_store %arg18[%c0_21, %c0_22, %c0_23, %c0_24, %c0_25], %68 {strides = array<i32>} : memref<1x2x2x8x8xbf16, #tpu.memory_space<vmem>>, vector<1x2x2x8x8xbf16>,
    %69 = arith.truncf %63 : vector<4x8x8xf32> to vector<4x8x8xbf16>
    "tpu.trace_start"() <{level = 10 : i32, message = "zqk,zkd->zqd"}> : () -> ()
    %cst_26 = arith.constant dense<0.000000e+00> : vector<4x8x16xf32>
    %70 = tpu.matmul %69, %48, %cst_26 {dimension_numbers = #tpu.dot_dimension_numbers<[2], [1], [1], [2], [0, 0, 0, 1, 1, 2], [0], [0]>} : vector<4x8x8xbf16>, vector<4x8x16xbf16>, vector<4x8x16xf32> -> vector<4x8x16xf32>
    "tpu.trace_stop"() : () -> ()
    %71 = vector.shape_cast %70 : vector<4x8x16xf32> to vector<2x2x8x16xf32>
    %72 = tpu.transpose %71, [0, 2, 1, 3] : vector<2x2x8x16xf32> -> vector<2x8x2x16xf32>
    %73 = vector.shape_cast %72 : vector<2x8x2x16xf32> to vector<16x32xf32>
    %74 = arith.truncf %73 : vector<16x32xf32> to vector<16x32xbf16>
    %c0_27 = arith.constant 0 : index
    %c0_28 = arith.constant 0 : index
    %c0_29 = arith.constant 0 : index
    %75 = vector.load %arg7[%c0_27, %c0_28, %c0_29] : memref<1x32x32xbf16, #tpu.memory_space<vmem>>, vector<1x32x32xbf16>
    %76 = vector.shape_cast %75 : vector<1x32x32xbf16> to vector<32x32xbf16>
    %cst_30 = arith.constant dense<0.000000e+00> : vector<16x32xf32>
    %77 = tpu.matmul %74, %76, %cst_30 {dimension_numbers = #tpu.dot_dimension_numbers<[1], [0], [0], [1], [0, 0, 1, 1], [], []>} : vector<16x32xbf16>, vector<32x32xbf16>, vector<16x32xf32> -> vector<16x32xf32>
    %c0_31 = arith.constant 0 : index
    %c0_32 = arith.constant 0 : index
    %c0_33 = arith.constant 0 : index
    %78 = vector.load %arg8[%c0_31, %c0_32, %c0_33] : memref<1x1x32xf32, #tpu.memory_space<vmem>>, vector<1x1x32xf32>
    %79 = vector.shape_cast %78 : vector<1x1x32xf32> to vector<1x32xf32>
    %80 = vector.broadcast %79 : vector<1x32xf32> to vector<16x32xf32>
    %81 = arith.addf %77, %80 : vector<16x32xf32>
    %82 = arith.addf %3, %81 : vector<16x32xf32>
    %c0_34 = arith.constant 0 : index
    %c0_35 = arith.constant 0 : index
    %c0_36 = arith.constant 0 : index
    %83 = vector.load %arg9[%c0_34, %c0_35, %c0_36] : memref<1x1x32xf32, #tpu.memory_space<vmem>>, vector<1x1x32xf32>
    %84 = vector.shape_cast %83 : vector<1x1x32xf32> to vector<1x32xf32>
    %c0_37 = arith.constant 0 : index
    %c0_38 = arith.constant 0 : index
    %c0_39 = arith.constant 0 : index
    %85 = vector.load %arg10[%c0_37, %c0_38, %c0_39] : memref<1x1x32xf32, #tpu.memory_space<vmem>>, vector<1x1x32xf32>
    %86 = vector.shape_cast %85 : vector<1x1x32xf32> to vector<1x32xf32>
    %cst_40 = arith.constant dense<0.000000e+00> : vector<16xf32>
    %87 = vector.multi_reduction <add>, %82, %cst_40 [1] : vector<16x32xf32> to vector<16xf32>
    %88 = vector.shape_cast %87 : vector<16xf32> to vector<16x1xf32>
    %cst_41 = arith.constant 3.200000e+01 : f32
    %89 = vector.broadcast %cst_41 : f32 to vector<16x1xf32>
    %90 = arith.divf %88, %89 : vector<16x1xf32>
    %91 = vector.broadcast %90 : vector<16x1xf32> to vector<16x32xf32>
    %92 = arith.subf %82, %91 : vector<16x32xf32>
    %93 = arith.mulf %92, %92 : vector<16x32xf32>
    %cst_42 = arith.constant dense<0.000000e+00> : vector<16xf32>
    %94 = vector.multi_reduction <add>, %93, %cst_42 [1] : vector<16x32xf32> to vector<16xf32>
    %95 = vector.shape_cast %94 : vector<16xf32> to vector<16x1xf32>
    %cst_43 = arith.constant 3.200000e+01 : f32
    %96 = vector.broadcast %cst_43 : f32 to vector<16x1xf32>
    %97 = arith.divf %95, %96 : vector<16x1xf32>
    %98 = vector.broadcast %90 : vector<16x1xf32> to vector<16x32xf32>
    %99 = arith.subf %82, %98 : vector<16x32xf32>
    %cst_44 = arith.constant 9.99999974E-6 : f32
    %100 = vector.broadcast %cst_44 : f32 to vector<16x1xf32>
    %101 = arith.addf %97, %100 : vector<16x1xf32>
    %102 = math.rsqrt %101 : vector<16x1xf32>
    %103 = vector.broadcast %102 : vector<16x1xf32> to vector<16x32xf32>
    %104 = arith.mulf %99, %103 : vector<16x32xf32>
    %105 = vector.broadcast %84 : vector<1x32xf32> to vector<16x32xf32>
    %106 = arith.mulf %104, %105 : vector<16x32xf32>
    %107 = vector.broadcast %86 : vector<1x32xf32> to vector<16x32xf32>
    %108 = arith.addf %106, %107 : vector<16x32xf32>
    %109 = arith.truncf %108 : vector<16x32xf32> to vector<16x32xbf16>
    %c0_45 = arith.constant 0 : index
    %c0_46 = arith.constant 0 : index
    %c0_47 = arith.constant 0 : index
    %110 = vector.load %arg11[%c0_45, %c0_46, %c0_47] : memref<1x32x128xbf16, #tpu.memory_space<vmem>>, vector<1x32x128xbf16>
    %111 = vector.shape_cast %110 : vector<1x32x128xbf16> to vector<32x128xbf16>
    %cst_48 = arith.constant dense<0.000000e+00> : vector<16x128xf32>
    %112 = tpu.matmul %109, %111, %cst_48 {dimension_numbers = #tpu.dot_dimension_numbers<[1], [0], [0], [1], [0, 0, 1, 1], [], []>} : vector<16x32xbf16>, vector<32x128xbf16>, vector<16x128xf32> -> vector<16x128xf32>
    %c0_49 = arith.constant 0 : index
    %c0_50 = arith.constant 0 : index
    %c0_51 = arith.constant 0 : index
    %113 = vector.load %arg12[%c0_49, %c0_50, %c0_51] : memref<1x1x128xf32, #tpu.memory_space<vmem>>, vector<1x1x128xf32>
    %114 = vector.shape_cast %113 : vector<1x1x128xf32> to vector<1x128xf32>
    %115 = vector.broadcast %114 : vector<1x128xf32> to vector<16x128xf32>
    %116 = arith.addf %112, %115 : vector<16x128xf32>
    %cst_52 = arith.constant 0.000000e+00 : f32
    %117 = vector.broadcast %cst_52 : f32 to vector<16x128xf32>
    %118 = arith.maximumf %116, %117 : vector<16x128xf32>
    %119 = arith.truncf %118 : vector<16x128xf32> to vector<16x128xbf16>
    %c0_53 = arith.constant 0 : index
    %c0_54 = arith.constant 0 : index
    %c0_55 = arith.constant 0 : index
    %120 = vector.load %arg13[%c0_53, %c0_54, %c0_55] : memref<1x128x32xbf16, #tpu.memory_space<vmem>>, vector<1x128x32xbf16>
    %121 = vector.shape_cast %120 : vector<1x128x32xbf16> to vector<128x32xbf16>
    %cst_56 = arith.constant dense<0.000000e+00> : vector<16x32xf32>
    %122 = tpu.matmul %119, %121, %cst_56 {dimension_numbers = #tpu.dot_dimension_numbers<[1], [0], [0], [1], [0, 0, 1, 1], [], []>} : vector<16x128xbf16>, vector<128x32xbf16>, vector<16x32xf32> -> vector<16x32xf32>
    %c0_57 = arith.constant 0 : index
    %c0_58 = arith.constant 0 : index
    %c0_59 = arith.constant 0 : index
    %123 = vector.load %arg14[%c0_57, %c0_58, %c0_59] : memref<1x1x32xf32, #tpu.memory_space<vmem>>, vector<1x1x32xf32>
    %124 = vector.shape_cast %123 : vector<1x1x32xf32> to vector<1x32xf32>
    %125 = vector.broadcast %124 : vector<1x32xf32> to vector<16x32xf32>
    %126 = arith.addf %122, %125 : vector<16x32xf32>
    %127 = arith.addf %82, %126 : vector<16x32xf32>
    %c0_60 = arith.constant 0 : index
    %c0_61 = arith.constant 0 : index
    %128 = vector.load %arg19[%c0_60, %c0_61] : memref<16x32xf32, #tpu.memory_space<vmem>>, vector<16x32xf32>
    tpu.vector_store %arg19[%c0_60, %c0_61], %127 {strides = array<i32>} : memref<16x32xf32, #tpu.memory_space<vmem>>, vector<16x32xf32>,
    %c1_i32 = arith.constant 1 : i32
    %129 = arith.cmpi eq, %arg1, %c1_i32 : i32
    %130 = arith.extui %129 : i1 to i32
    %c0_i32_62 = arith.constant 0 : i32
    %131 = arith.cmpi ne, %130, %c0_i32_62 : i32
    scf.if %131 {
      %c0_63 = arith.constant 0 : index
      %c0_64 = arith.constant 0 : index
      %132 = vector.load %arg15[%c0_63, %c0_64] : memref<1x32xf32, #tpu.memory_space<vmem>>, vector<1x32xf32>
      %c0_65 = arith.constant 0 : index
      %c0_66 = arith.constant 0 : index
      %133 = vector.load %arg16[%c0_65, %c0_66] : memref<1x32xf32, #tpu.memory_space<vmem>>, vector<1x32xf32>
      %cst_67 = arith.constant dense<0.000000e+00> : vector<16xf32>
      %134 = vector.multi_reduction <add>, %127, %cst_67 [1] : vector<16x32xf32> to vector<16xf32>
      %135 = vector.shape_cast %134 : vector<16xf32> to vector<16x1xf32>
      %cst_68 = arith.constant 3.200000e+01 : f32
      %136 = vector.broadcast %cst_68 : f32 to vector<16x1xf32>
      %137 = arith.divf %135, %136 : vector<16x1xf32>
      %138 = vector.broadcast %137 : vector<16x1xf32> to vector<16x32xf32>
      %139 = arith.subf %127, %138 : vector<16x32xf32>
      %140 = arith.mulf %139, %139 : vector<16x32xf32>
      %cst_69 = arith.constant dense<0.000000e+00> : vector<16xf32>
      %141 = vector.multi_reduction <add>, %140, %cst_69 [1] : vector<16x32xf32> to vector<16xf32>
      %142 = vector.shape_cast %141 : vector<16xf32> to vector<16x1xf32>
      %cst_70 = arith.constant 3.200000e+01 : f32
      %143 = vector.broadcast %cst_70 : f32 to vector<16x1xf32>
      %144 = arith.divf %142, %143 : vector<16x1xf32>
      %145 = vector.broadcast %137 : vector<16x1xf32> to vector<16x32xf32>
      %146 = arith.subf %127, %145 : vector<16x32xf32>
      %cst_71 = arith.constant 9.99999974E-6 : f32
      %147 = vector.broadcast %cst_71 : f32 to vector<16x1xf32>
      %148 = arith.addf %144, %147 : vector<16x1xf32>
      %149 = math.rsqrt %148 : vector<16x1xf32>
      %150 = vector.broadcast %149 : vector<16x1xf32> to vector<16x32xf32>
      %151 = arith.mulf %146, %150 : vector<16x32xf32>
      %152 = vector.broadcast %132 : vector<1x32xf32> to vector<16x32xf32>
      %153 = arith.mulf %151, %152 : vector<16x32xf32>
      %154 = vector.broadcast %133 : vector<1x32xf32> to vector<16x32xf32>
      %155 = arith.addf %153, %154 : vector<16x32xf32>
      %156 = vector.shape_cast %155 : vector<16x32xf32> to vector<2x8x32xf32>
      %157 = arith.truncf %156 : vector<2x8x32xf32> to vector<2x8x32xbf16>
      %c0_72 = arith.constant 0 : index
      %c0_73 = arith.constant 0 : index
      %c0_74 = arith.constant 0 : index
      %158 = vector.load %arg17[%c0_72, %c0_73, %c0_74] : memref<2x8x32xbf16, #tpu.memory_space<vmem>>, vector<2x8x32xbf16>
      tpu.vector_store %arg17[%c0_72, %c0_73, %c0_74], %157 {strides = array<i32>} : memref<2x8x32xbf16, #tpu.memory_space<vmem>>, vector<2x8x32xbf16>,
    } else {
    }
    return
  }
  func.func @transform_0(%arg0: i32, %arg1: i32) -> (i32, i32, i32) {
    %c0_i32 = arith.constant 0 : i32
    %c0_i32_0 = arith.constant 0 : i32
    %c0_i32_1 = arith.constant 0 : i32
    return %arg0, %c0_i32, %c0_i32_0 : i32, i32, i32
  }
  func.func @transform_1(%arg0: i32, %arg1: i32) -> (i32, i32) {
    %c0_i32 = arith.constant 0 : i32
    %c0_i32_0 = arith.constant 0 : i32
    %c0_i32_1 = arith.constant 0 : i32
    return %c0_i32, %c0_i32_0 : i32, i32
  }
  func.func @transform_2(%arg0: i32, %arg1: i32) -> (i32, i32, i32) {
    %c0_i32 = arith.constant 0 : i32
    %c0_i32_0 = arith.constant 0 : i32
    %c0_i32_1 = arith.constant 0 : i32
    return %arg1, %c0_i32, %c0_i32_0 : i32, i32, i32
  }
  func.func @transform_3(%arg0: i32, %arg1: i32) -> (i32, i32, i32) {
    %c0_i32 = arith.constant 0 : i32
    %c0_i32_0 = arith.constant 0 : i32
    %c0_i32_1 = arith.constant 0 : i32
    return %arg1, %c0_i32, %c0_i32_0 : i32, i32, i32
  }
  func.func @transform_4(%arg0: i32, %arg1: i32) -> (i32, i32, i32) {
    %c0_i32 = arith.constant 0 : i32
    %c0_i32_0 = arith.constant 0 : i32
    %c0_i32_1 = arith.constant 0 : i32
    return %arg1, %c0_i32, %c0_i32_0 : i32, i32, i32
  }
  func.func @transform_5(%arg0: i32, %arg1: i32) -> (i32, i32, i32) {
    %c0_i32 = arith.constant 0 : i32
    %c0_i32_0 = arith.constant 0 : i32
    %c0_i32_1 = arith.constant 0 : i32
    return %arg1, %c0_i32, %c0_i32_0 : i32, i32, i32
  }
  func.func @transform_6(%arg0: i32, %arg1: i32) -> (i32, i32, i32) {
    %c0_i32 = arith.constant 0 : i32
    %c0_i32_0 = arith.constant 0 : i32
    %c0_i32_1 = arith.constant 0 : i32
    return %arg1, %c0_i32, %c0_i32_0 : i32, i32, i32
  }
  func.func @transform_7(%arg0: i32, %arg1: i32) -> (i32, i32, i32) {
    %c0_i32 = arith.constant 0 : i32
    %c0_i32_0 = arith.constant 0 : i32
    %c0_i32_1 = arith.constant 0 : i32
    return %arg1, %c0_i32, %c0_i32_0 : i32, i32, i32
  }
  func.func @transform_8(%arg0: i32, %arg1: i32) -> (i32, i32, i32) {
    %c0_i32 = arith.constant 0 : i32
    %c0_i32_0 = arith.constant 0 : i32
    %c0_i32_1 = arith.constant 0 : i32
    return %arg1, %c0_i32, %c0_i32_0 : i32, i32, i32
  }
  func.func @transform_9(%arg0: i32, %arg1: i32) -> (i32, i32, i32) {
    %c0_i32 = arith.constant 0 : i32
    %c0_i32_0 = arith.constant 0 : i32
    %c0_i32_1 = arith.constant 0 : i32
    return %arg1, %c0_i32, %c0_i32_0 : i32, i32, i32
  }
  func.func @transform_10(%arg0: i32, %arg1: i32) -> (i32, i32, i32) {
    %c0_i32 = arith.constant 0 : i32
    %c0_i32_0 = arith.constant 0 : i32
    %c0_i32_1 = arith.constant 0 : i32
    return %arg1, %c0_i32, %c0_i32_0 : i32, i32, i32
  }
  func.func @transform_11(%arg0: i32, %arg1: i32) -> (i32, i32, i32) {
    %c0_i32 = arith.constant 0 : i32
    %c0_i32_0 = arith.constant 0 : i32
    %c0_i32_1 = arith.constant 0 : i32
    return %arg1, %c0_i32, %c0_i32_0 : i32, i32, i32
  }
  func.func @transform_12(%arg0: i32, %arg1: i32) -> (i32, i32, i32) {
    %c0_i32 = arith.constant 0 : i32
    %c0_i32_0 = arith.constant 0 : i32
    %c0_i32_1 = arith.constant 0 : i32
    return %arg1, %c0_i32, %c0_i32_0 : i32, i32, i32
  }
  func.func @transform_13(%arg0: i32, %arg1: i32) -> (i32, i32) {
    %c0_i32 = arith.constant 0 : i32
    %c0_i32_0 = arith.constant 0 : i32
    %c0_i32_1 = arith.constant 0 : i32
    return %c0_i32, %c0_i32_0 : i32, i32
  }
  func.func @transform_14(%arg0: i32, %arg1: i32) -> (i32, i32) {
    %c0_i32 = arith.constant 0 : i32
    %c0_i32_0 = arith.constant 0 : i32
    %c0_i32_1 = arith.constant 0 : i32
    return %c0_i32, %c0_i32_0 : i32, i32
  }
  func.func @transform_15(%arg0: i32, %arg1: i32) -> (i32, i32, i32) {
    %c0_i32 = arith.constant 0 : i32
    %c0_i32_0 = arith.constant 0 : i32
    %c0_i32_1 = arith.constant 0 : i32
    return %arg0, %c0_i32, %c0_i32_0 : i32, i32, i32
  }
  func.func @transform_16(%arg0: i32, %arg1: i32) -> (i32, i32, i32, i32, i32) {
    %c0_i32 = arith.constant 0 : i32
    %c0_i32_0 = arith.constant 0 : i32
    %c0_i32_1 = arith.constant 0 : i32
    %c0_i32_2 = arith.constant 0 : i32
    return %arg1, %arg0, %c0_i32, %c0_i32_0, %c0_i32_1 : i32, i32, i32, i32, i32
  }
}

</mosaic_0001>

<llo_original>
// kernel: tpu_custom_call.1
$region0: #{tpu_custom_call.1}
  #allocation0 [shape = 'u32[]', space=smem, size = 0x4, offset = 0x4, fixed_abs, tag = 'smem constant byte address 0x4 - core index']
  #allocation1 [shape = 'u32[144,128]{1,0:T(1,128)}', space=vmem, size = 0x12000, scoped, tag = 'internal scratch']
  #allocation2 [shape = 'f32[16,32]{1,0:T(8,128)}', space=vmem, size = 0x2000, scoped, tag = 'scratch operand']
  %s0 = inlined_call_operand.vmem [shape: f32[2,8,32], index: 0, kind: input, shape index: {}]
  %s1 = inlined_call_operand.vmem [shape: f32[8,8], index: 1, kind: input, shape index: {}]
  %s2 = inlined_call_operand.vmem [shape: f32[2,1,32], index: 2, kind: input, shape index: {}]
  %s3 = inlined_call_operand.vmem [shape: f32[2,1,32], index: 3, kind: input, shape index: {}]
  %s4 = inlined_call_operand.vmem [shape: bf16[2,32,96], index: 4, kind: input, shape index: {}]
  %s5 = inlined_call_operand.vmem [shape: bf16[2,32,32], index: 5, kind: input, shape index: {}]
  %s6 = inlined_call_operand.vmem [shape: f32[2,1,32], index: 6, kind: input, shape index: {}]
  %s7 = inlined_call_operand.vmem [shape: f32[2,1,32], index: 7, kind: input, shape index: {}]
  %s8 = inlined_call_operand.vmem [shape: f32[2,1,32], index: 8, kind: input, shape index: {}]
  %s9 = inlined_call_operand.vmem [shape: bf16[2,32,128], index: 9, kind: input, shape index: {}]
  %s10 = inlined_call_operand.vmem [shape: f32[2,1,128], index: 10, kind: input, shape index: {}]
  %s11 = inlined_call_operand.vmem [shape: bf16[2,128,32], index: 11, kind: input, shape index: {}]
  %s12 = inlined_call_operand.vmem [shape: f32[2,1,32], index: 12, kind: input, shape index: {}]
  %s13 = inlined_call_operand.vmem [shape: f32[1,32], index: 13, kind: input, shape index: {}]
  %s14 = inlined_call_operand.vmem [shape: f32[1,32], index: 14, kind: input, shape index: {}]
  %s15 = inlined_call_operand.hbm [shape: bf16[2,8,32], index: 15, kind: output, shape index: {0}]
  %s16 = inlined_call_operand.hbm [shape: bf16[2,2,2,8,8], index: 16, kind: output, shape index: {1}]
  %17 = xla_tuple %s15, %s16
  %s18 = sld [smem:[#allocation0]]
  $region109: #{tpu_custom_call.1} parent=0
    _
  %s20 = ssub.s32 1, %s18
  %s21 = scalar_select 0, %s20, %s18
  $region1: #{tpu_custom_call.1} parent=0
    #allocation3 [shape = 'u8[4096]{0}', space=vmem, size = 0x1000, scoped, tag = 'output window, operand 0, single buffered']
    #allocation4 [shape = 's32[2]{0}', space=sflag, size = 0x8, scoped, tag = 'scoped memory for tpu_custom_call.1']
    #allocation5 [shape = 'u8[16384]{0}', space=vmem, size = 0x4000, scoped, tag = 'output window, operand 1']
    #allocation6 [shape = 's32[2]{0}', space=sflag, size = 0x8, scoped, tag = 'scoped memory for tpu_custom_call.1']
    %22 = vsyncpa [#allocation4], 0
    %23 = vsyncpa [#allocation6], 0
    %s24 = scalar_lea.sflag [#allocation6], 1
    %25 = vsyncpa %s24, 0
    loop: start=0, step=1, limit=4
    $region2: #{tpu_custom_call.1} parent=1 // loop_pre_header
      _
    $region3: #{tpu_custom_call.1} parent=1 // loop_header
      %s27 = sphi 0, %s31
      %p28 = scmp.ge.s32.totalorder %s27, 4
      %s34 = sphi 0, %s46
      %s35 = sphi 0, %s42
      %s36 = sphi 0, %s34
      %s37 = sphi 0, %s35
      %s38 = sphi 0, %s36
      %s39 = sphi 0, %s37
      %s49 = sphi 0, %s51
      %s52 = sphi 0, %s49
      %s53 = sphi 0, %s52
      %s69 = sphi 0, %s53
      %s73 = sphi 0, %s73
      %s75 = sphi 0, %s73
      %s76 = sphi 0, %s75
      %s90 = sphi 0, %s76
      %s96 = sphi 0, %s98
      %s99 = sphi 0, %s96
      %s100 = sphi 0, %s99
      %s116 = sphi 0, %s100
      %s122 = sphi 0, %s124
      %s125 = sphi 0, %s122
      %s126 = sphi 0, %s125
      %s142 = sphi 0, %s126
      %s148 = sphi 0, %s150
      %s151 = sphi 0, %s148
      %s152 = sphi 0, %s151
      %s168 = sphi 0, %s152
      %s174 = sphi 0, %s176
      %s177 = sphi 0, %s174
      %s178 = sphi 0, %s177
      %s194 = sphi 0, %s178
      %s200 = sphi 0, %s202
      %s203 = sphi 0, %s200
      %s204 = sphi 0, %s203
      %s220 = sphi 0, %s204
      %s226 = sphi 0, %s228
      %s229 = sphi 0, %s226
      %s230 = sphi 0, %s229
      %s246 = sphi 0, %s230
      %s252 = sphi 0, %s254
      %s255 = sphi 0, %s252
      %s256 = sphi 0, %s255
      %s272 = sphi 0, %s256
      %s278 = sphi 0, %s280
      %s281 = sphi 0, %s278
      %s282 = sphi 0, %s281
      %s298 = sphi 0, %s282
      %s304 = sphi 0, %s306
      %s307 = sphi 0, %s304
      %s308 = sphi 0, %s307
      %s324 = sphi 0, %s308
      %s330 = sphi 0, %s332
      %s333 = sphi 0, %s330
      %s334 = sphi 0, %s333
      %s350 = sphi 0, %s334
      %s356 = sphi 0, %s358
      %s359 = sphi 0, %s356
      %s360 = sphi 0, %s359
      %s376 = sphi 0, %s360
      %s380 = sphi 0, %s380
      %s382 = sphi 0, %s380
      %s383 = sphi 0, %s382
      %s397 = sphi 0, %s383
      %s401 = sphi 0, %s401
      %s403 = sphi 0, %s401
      %s404 = sphi 0, %s403
      %s418 = sphi 0, %s404
      %s424 = sphi 0, %s426
      %s427 = sphi 0, %s424
      %s428 = sphi 0, %s427
      %s444 = sphi 0, %s428
      %s452 = sphi 0, %s454
      %s455 = sphi 0, %s452
      %s456 = sphi 0, %s455
      %s472 = sphi 0, %s456
    $region4: #{tpu_custom_call.1} parent=1 // loop_header_branch
      %30 = sbr.rel (%p28) target = $region8
    $region5: #{tpu_custom_call.1} parent=1 // loop_body
      %s32 = ssub.s32 %s27, 1
      %s33 = ssub.s32 %s27, 2
      %s40 = sadd.s32 1, %s35
      %p41 = scmp.ge.s32.totalorder %s40, 2
      %s42 = scalar_select %p41, 0, %s40
      %s43 = sadd.s32 1, %s34
      %s44 = scalar_select %p41, %s43, %s34
      %p45 = scmp.ge.s32.totalorder %s44, 1
      %s46 = scalar_select %p45, 0, %s44
      %s47 = ssub.s32 %s34, %s46
      %p48 = scmp.eq.s32.totalorder %s47, 0
      %s50 = sadd.s32 %s49, 1
      %s51 = scalar_select %p48, %s49, %s50
      %p54 = pneg %p48
      %p55 = scmp.eq.s32.totalorder %s27, 1
      %p56 = por %p54, %p55
      %p57 = scmp.ne.s32.totalorder %s49, %s52
      %p58 = scmp.eq.s32.totalorder %s27, 0
      %p59 = por %p57, %p58
      %p60 = scmp.ne.s32.totalorder %s49, %s52
      %p61 = scmp.eq.s32.totalorder %s32, 1
      %p62 = por %p60, %p61
      %p63 = scmp.ne.s32.totalorder %s52, %s53
      %p64 = scmp.eq.s32.totalorder %s32, 0
      %p65 = por %p63, %p64
      %p66 = scmp.ne.s32.totalorder %s52, %s53
      %p67 = scmp.eq.s32.totalorder %s33, 1
      %p68 = por %p66, %p67
      %p70 = scmp.ne.s32.totalorder %s53, %s69
      %p71 = scmp.eq.s32.totalorder %s33, 0
      %p72 = por %p70, %p71
      %s74 = sadd.s32 %s73, 1
      %p77 = scmp.eq.s32.totalorder %s27, 1
      %p78 = scmp.ne.s32.totalorder %s73, %s75
      %p79 = scmp.eq.s32.totalorder %s27, 0
      %p80 = por %p78, %p79
      %p81 = scmp.ne.s32.totalorder %s73, %s75
      %p82 = scmp.eq.s32.totalorder %s32, 1
      %p83 = por %p81, %p82
      %p84 = scmp.ne.s32.totalorder %s75, %s76
      %p85 = scmp.eq.s32.totalorder %s32, 0
      %p86 = por %p84, %p85
      %p87 = scmp.ne.s32.totalorder %s75, %s76
      %p88 = scmp.eq.s32.totalorder %s33, 1
      %p89 = por %p87, %p88
      %p91 = scmp.ne.s32.totalorder %s76, %s90
      %p92 = scmp.eq.s32.totalorder %s33, 0
      %p93 = por %p91, %p92
      %s94 = ssub.s32 %s35, %s42
      %p95 = scmp.eq.s32.totalorder %s94, 0
      %s97 = sadd.s32 %s96, 1
      %s98 = scalar_select %p95, %s96, %s97
      %p101 = pneg %p95
      %p102 = scmp.eq.s32.totalorder %s27, 1
      %p103 = por %p101, %p102
      %p104 = scmp.ne.s32.totalorder %s96, %s99
      %p105 = scmp.eq.s32.totalorder %s27, 0
      %p106 = por %p104, %p105
      %p107 = scmp.ne.s32.totalorder %s96, %s99
      %p108 = scmp.eq.s32.totalorder %s32, 1
      %p109 = por %p107, %p108
      %p110 = scmp.ne.s32.totalorder %s99, %s100
      %p111 = scmp.eq.s32.totalorder %s32, 0
      %p112 = por %p110, %p111
      %p113 = scmp.ne.s32.totalorder %s99, %s100
      %p114 = scmp.eq.s32.totalorder %s33, 1
      %p115 = por %p113, %p114
      %p117 = scmp.ne.s32.totalorder %s100, %s116
      %p118 = scmp.eq.s32.totalorder %s33, 0
      %p119 = por %p117, %p118
      %s120 = ssub.s32 %s35, %s42
      %p121 = scmp.eq.s32.totalorder %s120, 0
      %s123 = sadd.s32 %s122, 1
      %s124 = scalar_select %p121, %s122, %s123
      %p127 = pneg %p121
      %p128 = scmp.eq.s32.totalorder %s27, 1
      %p129 = por %p127, %p128
      %p130 = scmp.ne.s32.totalorder %s122, %s125
      %p131 = scmp.eq.s32.totalorder %s27, 0
      %p132 = por %p130, %p131
      %p133 = scmp.ne.s32.totalorder %s122, %s125
      %p134 = scmp.eq.s32.totalorder %s32, 1
      %p135 = por %p133, %p134
      %p136 = scmp.ne.s32.totalorder %s125, %s126
      %p137 = scmp.eq.s32.totalorder %s32, 0
      %p138 = por %p136, %p137
      %p139 = scmp.ne.s32.totalorder %s125, %s126
      %p140 = scmp.eq.s32.totalorder %s33, 1
      %p141 = por %p139, %p140
      %p143 = scmp.ne.s32.totalorder %s126, %s142
      %p144 = scmp.eq.s32.totalorder %s33, 0
      %p145 = por %p143, %p144
      %s146 = ssub.s32 %s35, %s42
      %p147 = scmp.eq.s32.totalorder %s146, 0
      %s149 = sadd.s32 %s148, 1
      %s150 = scalar_select %p147, %s148, %s149
      %p153 = pneg %p147
      %p154 = scmp.eq.s32.totalorder %s27, 1
      %p155 = por %p153, %p154
      %p156 = scmp.ne.s32.totalorder %s148, %s151
      %p157 = scmp.eq.s32.totalorder %s27, 0
      %p158 = por %p156, %p157
      %p159 = scmp.ne.s32.totalorder %s148, %s151
      %p160 = scmp.eq.s32.totalorder %s32, 1
      %p161 = por %p159, %p160
      %p162 = scmp.ne.s32.totalorder %s151, %s152
      %p163 = scmp.eq.s32.totalorder %s32, 0
      %p164 = por %p162, %p163
      %p165 = scmp.ne.s32.totalorder %s151, %s152
      %p166 = scmp.eq.s32.totalorder %s33, 1
      %p167 = por %p165, %p166
      %p169 = scmp.ne.s32.totalorder %s152, %s168
      %p170 = scmp.eq.s32.totalorder %s33, 0
      %p171 = por %p169, %p170
      %s172 = ssub.s32 %s35, %s42
      %p173 = scmp.eq.s32.totalorder %s172, 0
      %s175 = sadd.s32 %s174, 1
      %s176 = scalar_select %p173, %s174, %s175
      %p179 = pneg %p173
      %p180 = scmp.eq.s32.totalorder %s27, 1
      %p181 = por %p179, %p180
      %p182 = scmp.ne.s32.totalorder %s174, %s177
      %p183 = scmp.eq.s32.totalorder %s27, 0
      %p184 = por %p182, %p183
      %p185 = scmp.ne.s32.totalorder %s174, %s177
      %p186 = scmp.eq.s32.totalorder %s32, 1
      %p187 = por %p185, %p186
      %p188 = scmp.ne.s32.totalorder %s177, %s178
      %p189 = scmp.eq.s32.totalorder %s32, 0
      %p190 = por %p188, %p189
      %p191 = scmp.ne.s32.totalorder %s177, %s178
      %p192 = scmp.eq.s32.totalorder %s33, 1
      %p193 = por %p191, %p192
      %p195 = scmp.ne.s32.totalorder %s178, %s194
      %p196 = scmp.eq.s32.totalorder %s33, 0
      %p197 = por %p195, %p196
      %s198 = ssub.s32 %s35, %s42
      %p199 = scmp.eq.s32.totalorder %s198, 0
      %s201 = sadd.s32 %s200, 1
      %s202 = scalar_select %p199, %s200, %s201
      %p205 = pneg %p199
      %p206 = scmp.eq.s32.totalorder %s27, 1
      %p207 = por %p205, %p206
      %p208 = scmp.ne.s32.totalorder %s200, %s203
      %p209 = scmp.eq.s32.totalorder %s27, 0
      %p210 = por %p208, %p209
      %p211 = scmp.ne.s32.totalorder %s200, %s203
      %p212 = scmp.eq.s32.totalorder %s32, 1
      %p213 = por %p211, %p212
      %p214 = scmp.ne.s32.totalorder %s203, %s204
      %p215 = scmp.eq.s32.totalorder %s32, 0
      %p216 = por %p214, %p215
      %p217 = scmp.ne.s32.totalorder %s203, %s204
      %p218 = scmp.eq.s32.totalorder %s33, 1
      %p219 = por %p217, %p218
      %p221 = scmp.ne.s32.totalorder %s204, %s220
      %p222 = scmp.eq.s32.totalorder %s33, 0
      %p223 = por %p221, %p222
      %s224 = ssub.s32 %s35, %s42
      %p225 = scmp.eq.s32.totalorder %s224, 0
      %s227 = sadd.s32 %s226, 1
      %s228 = scalar_select %p225, %s226, %s227
      %p231 = pneg %p225
      %p232 = scmp.eq.s32.totalorder %s27, 1
      %p233 = por %p231, %p232
      %p234 = scmp.ne.s32.totalorder %s226, %s229
      %p235 = scmp.eq.s32.totalorder %s27, 0
      %p236 = por %p234, %p235
      %p237 = scmp.ne.s32.totalorder %s226, %s229
      %p238 = scmp.eq.s32.totalorder %s32, 1
      %p239 = por %p237, %p238
      %p240 = scmp.ne.s32.totalorder %s229, %s230
      %p241 = scmp.eq.s32.totalorder %s32, 0
      %p242 = por %p240, %p241
      %p243 = scmp.ne.s32.totalorder %s229, %s230
      %p244 = scmp.eq.s32.totalorder %s33, 1
      %p245 = por %p243, %p244
      %p247 = scmp.ne.s32.totalorder %s230, %s246
      %p248 = scmp.eq.s32.totalorder %s33, 0
      %p249 = por %p247, %p248
      %s250 = ssub.s32 %s35, %s42
      %p251 = scmp.eq.s32.totalorder %s250, 0
      %s253 = sadd.s32 %s252, 1
      %s254 = scalar_select %p251, %s252, %s253
      %p257 = pneg %p251
      %p258 = scmp.eq.s32.totalorder %s27, 1
      %p259 = por %p257, %p258
      %p260 = scmp.ne.s32.totalorder %s252, %s255
      %p261 = scmp.eq.s32.totalorder %s27, 0
      %p262 = por %p260, %p261
      %p263 = scmp.ne.s32.totalorder %s252, %s255
      %p264 = scmp.eq.s32.totalorder %s32, 1
      %p265 = por %p263, %p264
      %p266 = scmp.ne.s32.totalorder %s255, %s256
      %p267 = scmp.eq.s32.totalorder %s32, 0
      %p268 = por %p266, %p267
      %p269 = scmp.ne.s32.totalorder %s255, %s256
      %p270 = scmp.eq.s32.totalorder %s33, 1
      %p271 = por %p269, %p270
      %p273 = scmp.ne.s32.totalorder %s256, %s272
      %p274 = scmp.eq.s32.totalorder %s33, 0
      %p275 = por %p273, %p274
      %s276 = ssub.s32 %s35, %s42
      %p277 = scmp.eq.s32.totalorder %s276, 0
      %s279 = sadd.s32 %s278, 1
      %s280 = scalar_select %p277, %s278, %s279
      %p283 = pneg %p277
      %p284 = scmp.eq.s32.totalorder %s27, 1
      %p285 = por %p283, %p284
      %p286 = scmp.ne.s32.totalorder %s278, %s281
      %p287 = scmp.eq.s32.totalorder %s27, 0
      %p288 = por %p286, %p287
      %p289 = scmp.ne.s32.totalorder %s278, %s281
      %p290 = scmp.eq.s32.totalorder %s32, 1
      %p291 = por %p289, %p290
      %p292 = scmp.ne.s32.totalorder %s281, %s282
      %p293 = scmp.eq.s32.totalorder %s32, 0
      %p294 = por %p292, %p293
      %p295 = scmp.ne.s32.totalorder %s281, %s282
      %p296 = scmp.eq.s32.totalorder %s33, 1
      %p297 = por %p295, %p296
      %p299 = scmp.ne.s32.totalorder %s282, %s298
      %p300 = scmp.eq.s32.totalorder %s33, 0
      %p301 = por %p299, %p300
      %s302 = ssub.s32 %s35, %s42
      %p303 = scmp.eq.s32.totalorder %s302, 0
      %s305 = sadd.s32 %s304, 1
      %s306 = scalar_select %p303, %s304, %s305
      %p309 = pneg %p303
      %p310 = scmp.eq.s32.totalorder %s27, 1
      %p311 = por %p309, %p310
      %p312 = scmp.ne.s32.totalorder %s304, %s307
      %p313 = scmp.eq.s32.totalorder %s27, 0
      %p314 = por %p312, %p313
      %p315 = scmp.ne.s32.totalorder %s304, %s307
      %p316 = scmp.eq.s32.totalorder %s32, 1
      %p317 = por %p315, %p316
      %p318 = scmp.ne.s32.totalorder %s307, %s308
      %p319 = scmp.eq.s32.totalorder %s32, 0
      %p320 = por %p318, %p319
      %p321 = scmp.ne.s32.totalorder %s307, %s308
      %p322 = scmp.eq.s32.totalorder %s33, 1
      %p323 = por %p321, %p322
      %p325 = scmp.ne.s32.totalorder %s308, %s324
      %p326 = scmp.eq.s32.totalorder %s33, 0
      %p327 = por %p325, %p326
      %s328 = ssub.s32 %s35, %s42
      %p329 = scmp.eq.s32.totalorder %s328, 0
      %s331 = sadd.s32 %s330, 1
      %s332 = scalar_select %p329, %s330, %s331
      %p335 = pneg %p329
      %p336 = scmp.eq.s32.totalorder %s27, 1
      %p337 = por %p335, %p336
      %p338 = scmp.ne.s32.totalorder %s330, %s333
      %p339 = scmp.eq.s32.totalorder %s27, 0
      %p340 = por %p338, %p339
      %p341 = scmp.ne.s32.totalorder %s330, %s333
      %p342 = scmp.eq.s32.totalorder %s32, 1
      %p343 = por %p341, %p342
      %p344 = scmp.ne.s32.totalorder %s333, %s334
      %p345 = scmp.eq.s32.totalorder %s32, 0
      %p346 = por %p344, %p345
      %p347 = scmp.ne.s32.totalorder %s333, %s334
      %p348 = scmp.eq.s32.totalorder %s33, 1
      %p349 = por %p347, %p348
      %p351 = scmp.ne.s32.totalorder %s334, %s350
      %p352 = scmp.eq.s32.totalorder %s33, 0
      %p353 = por %p351, %p352
      %s354 = ssub.s32 %s35, %s42
      %p355 = scmp.eq.s32.totalorder %s354, 0
      %s357 = sadd.s32 %s356, 1
      %s358 = scalar_select %p355, %s356, %s357
      %p361 = pneg %p355
      %p362 = scmp.eq.s32.totalorder %s27, 1
      %p363 = por %p361, %p362
      %p364 = scmp.ne.s32.totalorder %s356, %s359
      %p365 = scmp.eq.s32.totalorder %s27, 0
      %p366 = por %p364, %p365
      %p367 = scmp.ne.s32.totalorder %s356, %s359
      %p368 = scmp.eq.s32.totalorder %s32, 1
      %p369 = por %p367, %p368
      %p370 = scmp.ne.s32.totalorder %s359, %s360
      %p371 = scmp.eq.s32.totalorder %s32, 0
      %p372 = por %p370, %p371
      %p373 = scmp.ne.s32.totalorder %s359, %s360
      %p374 = scmp.eq.s32.totalorder %s33, 1
      %p375 = por %p373, %p374
      %p377 = scmp.ne.s32.totalorder %s360, %s376
      %p378 = scmp.eq.s32.totalorder %s33, 0
      %p379 = por %p377, %p378
      %s381 = sadd.s32 %s380, 1
      %p384 = scmp.eq.s32.totalorder %s27, 1
      %p385 = scmp.ne.s32.totalorder %s380, %s382
      %p386 = scmp.eq.s32.totalorder %s27, 0
      %p387 = por %p385, %p386
      %p388 = scmp.ne.s32.totalorder %s380, %s382
      %p389 = scmp.eq.s32.totalorder %s32, 1
      %p390 = por %p388, %p389
      %p391 = scmp.ne.s32.totalorder %s382, %s383
      %p392 = scmp.eq.s32.totalorder %s32, 0
      %p393 = por %p391, %p392
      %p394 = scmp.ne.s32.totalorder %s382, %s383
      %p395 = scmp.eq.s32.totalorder %s33, 1
      %p396 = por %p394, %p395
      %p398 = scmp.ne.s32.totalorder %s383, %s397
      %p399 = scmp.eq.s32.totalorder %s33, 0
      %p400 = por %p398, %p399
      %s402 = sadd.s32 %s401, 1
      %p405 = scmp.eq.s32.totalorder %s27, 1
      %p406 = scmp.ne.s32.totalorder %s401, %s403
      %p407 = scmp.eq.s32.totalorder %s27, 0
      %p408 = por %p406, %p407
      %p409 = scmp.ne.s32.totalorder %s401, %s403
      %p410 = scmp.eq.s32.totalorder %s32, 1
      %p411 = por %p409, %p410
      %p412 = scmp.ne.s32.totalorder %s403, %s404
      %p413 = scmp.eq.s32.totalorder %s32, 0
      %p414 = por %p412, %p413
      %p415 = scmp.ne.s32.totalorder %s403, %s404
      %p416 = scmp.eq.s32.totalorder %s33, 1
      %p417 = por %p415, %p416
      %p419 = scmp.ne.s32.totalorder %s404, %s418
      %p420 = scmp.eq.s32.totalorder %s33, 0
      %p421 = por %p419, %p420
      %s422 = ssub.s32 %s34, %s46
      %p423 = scmp.eq.s32.totalorder %s422, 0
      %s425 = sadd.s32 %s424, 1
      %s426 = scalar_select %p423, %s424, %s425
      %p429 = pneg %p423
      %p430 = scmp.eq.s32.totalorder %s27, 1
      %p431 = por %p429, %p430
      %p432 = scmp.ne.s32.totalorder %s424, %s427
      %p433 = scmp.eq.s32.totalorder %s27, 0
      %p434 = por %p432, %p433
      %p435 = scmp.ne.s32.totalorder %s424, %s427
      %p436 = scmp.eq.s32.totalorder %s32, 1
      %p437 = por %p435, %p436
      %p438 = scmp.ne.s32.totalorder %s427, %s428
      %p439 = scmp.eq.s32.totalorder %s32, 0
      %p440 = por %p438, %p439
      %p441 = scmp.ne.s32.totalorder %s427, %s428
      %p442 = scmp.eq.s32.totalorder %s33, 1
      %p443 = por %p441, %p442
      %p445 = scmp.ne.s32.totalorder %s428, %s444
      %p446 = scmp.eq.s32.totalorder %s33, 0
      %p447 = por %p445, %p446
      %s448 = ssub.s32 %s35, %s42
      %s449 = ssub.s32 %s34, %s46
      %s450 = sor.u32 %s448, %s449
      %p451 = scmp.eq.s32.totalorder %s450, 0
      %s453 = sadd.s32 %s452, 1
      %s454 = scalar_select %p451, %s452, %s453
      %p457 = pneg %p451
      %p458 = scmp.eq.s32.totalorder %s27, 1
      %p459 = por %p457, %p458
      %p460 = scmp.ne.s32.totalorder %s452, %s455
      %p461 = scmp.eq.s32.totalorder %s27, 0
      %p462 = por %p460, %p461
      %p463 = scmp.ne.s32.totalorder %s452, %s455
      %p464 = scmp.eq.s32.totalorder %s32, 1
      %p465 = por %p463, %p464
      %p466 = scmp.ne.s32.totalorder %s455, %s456
      %p467 = scmp.eq.s32.totalorder %s32, 0
      %p468 = por %p466, %p467
      %p469 = scmp.ne.s32.totalorder %s455, %s456
      %p470 = scmp.eq.s32.totalorder %s33, 1
      %p471 = por %p469, %p470
      %p473 = scmp.ne.s32.totalorder %s456, %s472
      %p474 = scmp.eq.s32.totalorder %s33, 0
      %p475 = por %p473, %p474
      %p476 = scmp.le.s32.totalorder 1, %s27
      %p477 = scmp.lt.s32.totalorder %s27, 3
      %p478 = pnand %p476, %p477
      %p479 = pneg %p478
      // Predicated region
      $region9: #{tpu_custom_call.1} parent=5 // pred_check
        _
      $region10: #{tpu_custom_call.1} parent=5 // pred_check_branch
        %481 = sbr.rel (%p478) target = $region12
      $region11: #{tpu_custom_call.1} parent=5 // pred_region
        %s482 = ssub.s32 %s27, 1
        // Predicated region
        $region13: #{tpu_custom_call.1} parent=11 // pred_check
          %p483 = pneg %p65
        $region14: #{tpu_custom_call.1} parent=11 // pred_check_branch
          %485 = sbr.rel (%p483) target = $region16
        $region15: #{tpu_custom_call.1} parent=11 // pred_region
          %s486 = smul.u32 2, %s36
          %p487 = scmp.lt.s32.totalorder %s486, 1
          %s488 = scalar_select %p487, %s486, 1
          %s489 = smul.addr %s488, 8
          %s490 = scalar_lea.vmem %s0, %s489
          %s491 = smul.u32 2, %s36
        $region16: #{tpu_custom_call.1} parent=11 // pred_fallthru
          _
        // Predicated region
        $region17: #{tpu_custom_call.1} parent=11 // pred_check
          %p492 = pneg %p86
        $region18: #{tpu_custom_call.1} parent=11 // pred_check_branch
          %494 = sbr.rel (%p492) target = $region20
        $region19: #{tpu_custom_call.1} parent=11 // pred_region
          _
        $region20: #{tpu_custom_call.1} parent=11 // pred_fallthru
          _
        // Predicated region
        $region21: #{tpu_custom_call.1} parent=11 // pred_check
          %p495 = pneg %p393
        $region22: #{tpu_custom_call.1} parent=11 // pred_check_branch
          %497 = sbr.rel (%p495) target = $region24
        $region23: #{tpu_custom_call.1} parent=11 // pred_region
          _
        $region24: #{tpu_custom_call.1} parent=11 // pred_fallthru
          _
        // Predicated region
        $region25: #{tpu_custom_call.1} parent=11 // pred_check
          %p498 = pneg %p414
        $region26: #{tpu_custom_call.1} parent=11 // pred_check_branch
          %500 = sbr.rel (%p498) target = $region28
        $region27: #{tpu_custom_call.1} parent=11 // pred_region
          _
        $region28: #{tpu_custom_call.1} parent=11 // pred_fallthru
          _
      $region12: #{tpu_custom_call.1} parent=5 // pred_fallthru
        _
      %p501 = scmp.lt.s32.totalorder %s27, 2
      // Predicated region
      $region29: #{tpu_custom_call.1} parent=5 // pred_check
        %p502 = pneg %p501
      $region30: #{tpu_custom_call.1} parent=5 // pred_check_branch
        %504 = sbr.rel (%p502) target = $region32
      $region31: #{tpu_custom_call.1} parent=5 // pred_region
        // Predicated region
        $region33: #{tpu_custom_call.1} parent=31 // pred_check
          %p505 = pneg %p106
        $region34: #{tpu_custom_call.1} parent=31 // pred_check_branch
          %507 = sbr.rel (%p505) target = $region36
        $region35: #{tpu_custom_call.1} parent=31 // pred_region
          %p508 = scmp.lt.s32.totalorder %s35, 1
          %s509 = scalar_select %p508, %s35, 1
          %s510 = scalar_lea.vmem %s2, %s509
        $region36: #{tpu_custom_call.1} parent=31 // pred_fallthru
          _
        // Predicated region
        $region37: #{tpu_custom_call.1} parent=31 // pred_check
          %p511 = pneg %p132
        $region38: #{tpu_custom_call.1} parent=31 // pred_check_branch
          %513 = sbr.rel (%p511) target = $region40
        $region39: #{tpu_custom_call.1} parent=31 // pred_region
          %p514 = scmp.lt.s32.totalorder %s35, 1
          %s515 = scalar_select %p514, %s35, 1
          %s516 = scalar_lea.vmem %s3, %s515
        $region40: #{tpu_custom_call.1} parent=31 // pred_fallthru
          _
        // Predicated region
        $region41: #{tpu_custom_call.1} parent=31 // pred_check
          %p517 = pneg %p158
        $region42: #{tpu_custom_call.1} parent=31 // pred_check_branch
          %519 = sbr.rel (%p517) target = $region44
        $region43: #{tpu_custom_call.1} parent=31 // pred_region
          %p520 = scmp.lt.s32.totalorder %s35, 1
          %s521 = scalar_select %p520, %s35, 1
          %s522 = smul.addr %s521, 4
          %s523 = smul.addr %s522, 4
          %s524 = scalar_lea.vmem %s4, %s523
        $region44: #{tpu_custom_call.1} parent=31 // pred_fallthru
          _
        // Predicated region
        $region45: #{tpu_custom_call.1} parent=31 // pred_check
          %p525 = pneg %p184
        $region46: #{tpu_custom_call.1} parent=31 // pred_check_branch
          %527 = sbr.rel (%p525) target = $region48
        $region47: #{tpu_custom_call.1} parent=31 // pred_region
          %p528 = scmp.lt.s32.totalorder %s35, 1
          %s529 = scalar_select %p528, %s35, 1
          %s530 = smul.addr %s529, 4
          %s531 = smul.addr %s530, 4
          %s532 = scalar_lea.vmem %s5, %s531
        $region48: #{tpu_custom_call.1} parent=31 // pred_fallthru
          _
        // Predicated region
        $region49: #{tpu_custom_call.1} parent=31 // pred_check
          %p533 = pneg %p210
        $region50: #{tpu_custom_call.1} parent=31 // pred_check_branch
          %535 = sbr.rel (%p533) target = $region52
        $region51: #{tpu_custom_call.1} parent=31 // pred_region
          %p536 = scmp.lt.s32.totalorder %s35, 1
          %s537 = scalar_select %p536, %s35, 1
          %s538 = scalar_lea.vmem %s6, %s537
        $region52: #{tpu_custom_call.1} parent=31 // pred_fallthru
          _
        // Predicated region
        $region53: #{tpu_custom_call.1} parent=31 // pred_check
          %p539 = pneg %p236
        $region54: #{tpu_custom_call.1} parent=31 // pred_check_branch
          %541 = sbr.rel (%p539) target = $region56
        $region55: #{tpu_custom_call.1} parent=31 // pred_region
          %p542 = scmp.lt.s32.totalorder %s35, 1
          %s543 = scalar_select %p542, %s35, 1
          %s544 = scalar_lea.vmem %s7, %s543
        $region56: #{tpu_custom_call.1} parent=31 // pred_fallthru
          _
        // Predicated region
        $region57: #{tpu_custom_call.1} parent=31 // pred_check
          %p545 = pneg %p262
        $region58: #{tpu_custom_call.1} parent=31 // pred_check_branch
          %547 = sbr.rel (%p545) target = $region60
        $region59: #{tpu_custom_call.1} parent=31 // pred_region
          %p548 = scmp.lt.s32.totalorder %s35, 1
          %s549 = scalar_select %p548, %s35, 1
          %s550 = scalar_lea.vmem %s8, %s549
        $region60: #{tpu_custom_call.1} parent=31 // pred_fallthru
          _
        // Predicated region
        $region61: #{tpu_custom_call.1} parent=31 // pred_check
          %p551 = pneg %p288
        $region62: #{tpu_custom_call.1} parent=31 // pred_check_branch
          %553 = sbr.rel (%p551) target = $region64
        $region63: #{tpu_custom_call.1} parent=31 // pred_region
          %p554 = scmp.lt.s32.totalorder %s35, 1
          %s555 = scalar_select %p554, %s35, 1
          %s556 = smul.addr %s555, 4
          %s557 = smul.addr %s556, 4
          %s558 = scalar_lea.vmem %s9, %s557
        $region64: #{tpu_custom_call.1} parent=31 // pred_fallthru
          _
        // Predicated region
        $region65: #{tpu_custom_call.1} parent=31 // pred_check
          %p559 = pneg %p314
        $region66: #{tpu_custom_call.1} parent=31 // pred_check_branch
          %561 = sbr.rel (%p559) target = $region68
        $region67: #{tpu_custom_call.1} parent=31 // pred_region
          %p562 = scmp.lt.s32.totalorder %s35, 1
          %s563 = scalar_select %p562, %s35, 1
          %s564 = scalar_lea.vmem %s10, %s563
        $region68: #{tpu_custom_call.1} parent=31 // pred_fallthru
          _
        // Predicated region
        $region69: #{tpu_custom_call.1} parent=31 // pred_check
          %p565 = pneg %p340
        $region70: #{tpu_custom_call.1} parent=31 // pred_check_branch
          %567 = sbr.rel (%p565) target = $region72
        $region71: #{tpu_custom_call.1} parent=31 // pred_region
          %p568 = scmp.lt.s32.totalorder %s35, 1
          %s569 = scalar_select %p568, %s35, 1
          %s570 = smul.addr %s569, 16
          %s571 = smul.addr %s570, 4
          %s572 = scalar_lea.vmem %s11, %s571
        $region72: #{tpu_custom_call.1} parent=31 // pred_fallthru
          _
        // Predicated region
        $region73: #{tpu_custom_call.1} parent=31 // pred_check
          %p573 = pneg %p366
        $region74: #{tpu_custom_call.1} parent=31 // pred_check_branch
          %575 = sbr.rel (%p573) target = $region76
        $region75: #{tpu_custom_call.1} parent=31 // pred_region
          %p576 = scmp.lt.s32.totalorder %s35, 1
          %s577 = scalar_select %p576, %s35, 1
          %s578 = scalar_lea.vmem %s12, %s577
        $region76: #{tpu_custom_call.1} parent=31 // pred_fallthru
          _
      $region32: #{tpu_custom_call.1} parent=5 // pred_fallthru
        _
      %p579 = scmp.le.s32.totalorder 1, %s27
      %p580 = scmp.lt.s32.totalorder %s27, 3
      %p581 = pnand %p579, %p580
      %p582 = pneg %p581
      // Predicated region
      $region77: #{tpu_custom_call.1} parent=5 // pred_check
        _
      $region78: #{tpu_custom_call.1} parent=5 // pred_check_branch
        %584 = sbr.rel (%p581) target = $region80
      $region79: #{tpu_custom_call.1} parent=5 // pred_region
        %s585 = ssub.s32 %s27, 1
        %s586 = smul.u32 2, %s36
        %p587 = scmp.lt.s32.totalorder %s586, 1
        %s588 = scalar_select %p587, %s586, 1
        %s589 = smul.addr %s588, 8
        %s590 = scalar_lea.vmem %s0, %s589
        %p591 = pneg %p65
        %p592 = pneg %p62
        %p593 = pneg %p86
        %p594 = pneg %p83
        %p595 = scmp.lt.s32.totalorder %s37, 1
        %s596 = scalar_select %p595, %s37, 1
        %s597 = scalar_lea.vmem %s2, %s596
        %p598 = pneg %p112
        %p599 = pneg %p109
        %p600 = scmp.lt.s32.totalorder %s37, 1
        %s601 = scalar_select %p600, %s37, 1
        %s602 = scalar_lea.vmem %s3, %s601
        %p603 = pneg %p138
        %p604 = pneg %p135
        %p605 = scmp.lt.s32.totalorder %s37, 1
        %s606 = scalar_select %p605, %s37, 1
        %s607 = smul.addr %s606, 4
        %s608 = smul.addr %s607, 4
        %s609 = scalar_lea.vmem %s4, %s608
        %p610 = pneg %p164
        %p611 = pneg %p161
        %p612 = scmp.lt.s32.totalorder %s37, 1
        %s613 = scalar_select %p612, %s37, 1
        %s614 = smul.addr %s613, 4
        %s615 = smul.addr %s614, 4
        %s616 = scalar_lea.vmem %s5, %s615
        %p617 = pneg %p190
        %p618 = pneg %p187
        %p619 = scmp.lt.s32.totalorder %s37, 1
        %s620 = scalar_select %p619, %s37, 1
        %s621 = scalar_lea.vmem %s6, %s620
        %p622 = pneg %p216
        %p623 = pneg %p213
        %p624 = scmp.lt.s32.totalorder %s37, 1
        %s625 = scalar_select %p624, %s37, 1
        %s626 = scalar_lea.vmem %s7, %s625
        %p627 = pneg %p242
        %p628 = pneg %p239
        %p629 = scmp.lt.s32.totalorder %s37, 1
        %s630 = scalar_select %p629, %s37, 1
        %s631 = scalar_lea.vmem %s8, %s630
        %p632 = pneg %p268
        %p633 = pneg %p265
        %p634 = scmp.lt.s32.totalorder %s37, 1
        %s635 = scalar_select %p634, %s37, 1
        %s636 = smul.addr %s635, 4
        %s637 = smul.addr %s636, 4
        %s638 = scalar_lea.vmem %s9, %s637
        %p639 = pneg %p294
        %p640 = pneg %p291
        %p641 = scmp.lt.s32.totalorder %s37, 1
        %s642 = scalar_select %p641, %s37, 1
        %s643 = scalar_lea.vmem %s10, %s642
        %p644 = pneg %p320
        %p645 = pneg %p317
        %p646 = scmp.lt.s32.totalorder %s37, 1
        %s647 = scalar_select %p646, %s37, 1
        %s648 = smul.addr %s647, 16
        %s649 = smul.addr %s648, 4
        %s650 = scalar_lea.vmem %s11, %s649
        %p651 = pneg %p346
        %p652 = pneg %p343
        %p653 = scmp.lt.s32.totalorder %s37, 1
        %s654 = scalar_select %p653, %s37, 1
        %s655 = scalar_lea.vmem %s12, %s654
        %p656 = pneg %p372
        %p657 = pneg %p369
        %p658 = pneg %p393
        %p659 = pneg %p390
        %p660 = pneg %p414
        %p661 = pneg %p411
        %p662 = pneg %p440
        %p663 = pneg %p437
        %p664 = pneg %p468
        %p665 = pneg %p465
        %s666 = sand.u32 %s455, 1
        %s667 = scalar_lea.sflag [#allocation6], %s666
        %s668 = sand.u32 %s455, 1
        %s669 = smul.addr %s668, 16
        %s670 = scalar_lea.vmem [#allocation5], %s669
        %s671 = smul.u32 2, %s36
        %p672 = scmp.lt.s32.totalorder %s671, 1
        %s673 = scalar_select %p672, %s671, 1
        %s674 = smul.addr %s673, 8
        %s675 = scalar_lea.vmem %s0, %s674
        %s676 = smul.u32 2, %s36
        %p677 = scmp.lt.s32.totalorder %s37, 1
        %s678 = scalar_select %p677, %s37, 1
        %s679 = scalar_lea.vmem %s2, %s678
        %p680 = scmp.lt.s32.totalorder %s37, 1
        %s681 = scalar_select %p680, %s37, 1
        %s682 = scalar_lea.vmem %s3, %s681
        %p683 = scmp.lt.s32.totalorder %s37, 1
        %s684 = scalar_select %p683, %s37, 1
        %s685 = smul.addr %s684, 4
        %s686 = smul.addr %s685, 4
        %s687 = scalar_lea.vmem %s4, %s686
        %p688 = scmp.lt.s32.totalorder %s37, 1
        %s689 = scalar_select %p688, %s37, 1
        %s690 = smul.addr %s689, 4
        %s691 = smul.addr %s690, 4
        %s692 = scalar_lea.vmem %s5, %s691
        %p693 = scmp.lt.s32.totalorder %s37, 1
        %s694 = scalar_select %p693, %s37, 1
        %s695 = scalar_lea.vmem %s6, %s694
        %p696 = scmp.lt.s32.totalorder %s37, 1
        %s697 = scalar_select %p696, %s37, 1
        %s698 = scalar_lea.vmem %s7, %s697
        %p699 = scmp.lt.s32.totalorder %s37, 1
        %s700 = scalar_select %p699, %s37, 1
        %s701 = scalar_lea.vmem %s8, %s700
        %p702 = scmp.lt.s32.totalorder %s37, 1
        %s703 = scalar_select %p702, %s37, 1
        %s704 = smul.addr %s703, 4
        %s705 = smul.addr %s704, 4
        %s706 = scalar_lea.vmem %s9, %s705
        %p707 = scmp.lt.s32.totalorder %s37, 1
        %s708 = scalar_select %p707, %s37, 1
        %s709 = scalar_lea.vmem %s10, %s708
        %p710 = scmp.lt.s32.totalorder %s37, 1
        %s711 = scalar_select %p710, %s37, 1
        %s712 = smul.addr %s711, 16
        %s713 = smul.addr %s712, 4
        %s714 = scalar_lea.vmem %s11, %s713
        %p715 = scmp.lt.s32.totalorder %s37, 1
        %s716 = scalar_select %p715, %s37, 1
        %s717 = scalar_lea.vmem %s12, %s716
        %s718 = smul.u32 2, %s36
        %s719 = smul.u32 2, %s36
        %p721 = scmp.eq.s32.totalorder %s37, 0
        // Predicated region
        $region81: #{tpu_custom_call.1} parent=79 // pred_check
          %p722 = pneg %p721
        $region82: #{tpu_custom_call.1} parent=79 // pred_check_branch
          %724 = sbr.rel (%p722) target = $region84
        $region83: #{tpu_custom_call.1} parent=79 // pred_region
          %v725 = vld [vmem:[%s675] sm:$0xff]
          %v726 = vld [vmem:[%s675 + $0x8] sm:$0xff]
          %vm727 = vcmask 261120
          %728 = vst.msk [vmem:[#allocation2] sm:$0xff] %vm727, %v725
          %729 = vst.msk [vmem:[#allocation2 + $0x8] sm:$0xff] %vm727, %v726
        $region84: #{tpu_custom_call.1} parent=79 // pred_fallthru
          _
        %v730 = vld [vmem:[#allocation2] sm:$0xff]
        %v731 = vld [vmem:[#allocation2 + $0x8] sm:$0xff]
        %v732 = vld [vmem:[%s679] sm:$0x1]
        %v733 = vld [vmem:[%s682] sm:$0x1]
        %vm734 = vcmask 261120
        %v735 = vsel %vm734, %v730, 0.0
        %736 = vadd.xlane.f32.xlu0 %v735
        %v737 = vpop.xlane.xlu0 %736
        %v738 = vsel %vm734, %v731, 0.0
        %739 = vadd.xlane.f32.xlu0 %v738
        %v740 = vpop.xlane.xlu0 %739
        %v741 = vrcp.pop 32.0
        %v742 = vmul.f32 %v737, %v741
        %v743 = vmul.f32 %v740, %v741
        %v744 = vsub.f32 %v730, %v742
        %v745 = vsub.f32 %v731, %v743
        %v746 = vmul.f32 %v744, %v744
        %v747 = vmul.f32 %v745, %v745
        %v748 = vsel %vm734, %v746, 0.0
        %749 = vadd.xlane.f32.xlu0 %v748
        %v750 = vpop.xlane.xlu0 %749
        %v751 = vsel %vm734, %v747, 0.0
        %752 = vadd.xlane.f32.xlu0 %v751
        %v753 = vpop.xlane.xlu0 %752
        %v754 = vmul.f32 %v750, %v741
        %v755 = vmul.f32 %v753, %v741
        %v756 = vadd.f32 %v754, 1e-05
        %v757 = vadd.f32 %v755, 1e-05
        %v758 = vrsqrt.pop %v756
        %v759 = vrsqrt.pop %v757
        %v760 = vmul.f32 %v744, %v758
        %v761 = vmul.f32 %v745, %v759
        %v763 = vlaneseq
        %v764 = vshrl.u32 %v763, 7
        %v765 = vsub.s32 0, %v764
        %v766 = vrot.slane %v732, %v765
        %v768 = vmul.f32 %v760, %v766
        %v769 = vmul.f32 %v761, %v766
        %v771 = vlaneseq
        %v772 = vshrl.u32 %v771, 7
        %v773 = vsub.s32 0, %v772
        %v774 = vrot.slane %v733, %v773
        %v776 = vadd.f32 %v768, %v774
        %v777 = vadd.f32 %v769, %v774
        %v778 = vpack.c.bf16 %v777, %v776
        %v779 = vld [vmem:[%s687] sm:$0xf]
        %v780 = vld [vmem:[%s687 + $0x4] sm:$0xf]
        %v781 = vld [vmem:[%s687 + $0x8] sm:$0xf]
        %v782 = vld [vmem:[%s687 + $0xc] sm:$0xf]
        %v787 = vunpack.c.l.b16 %v779
        %v788 = vunpack.c.l.b16 %v780
        %v789 = vunpack.c.l.b16 %v781
        %v790 = vunpack.c.l.b16 %v782
        %v791 = vpack.c.b16 %v788, %v787
        %v792 = vpack.c.b16 %v790, %v789
        %v796 = vsel %vm734, %v778, 0
        %798 = vmatprep.subr.bf16.mxu0 0
        %799 = vmatpush1.bf16.msra.mxu0 %v791
        %800 = vmatprep.subr.bf16.mxu0 0
        %801 = vmatpush1.bf16.msra.mxu0 %v792
        %802 = vmatprep.subr.bf16.mxu0 0
        %803 = vmatpush1.bf16.msra.mxu0 0
        %804 = vmatprep.subr.bf16.mxu0 0
        %805 = vmatpush1.bf16.msra.mxu0 0
        %806 = vmatprep.subr.bf16.mxu0 0
        %807 = vmatpush1.bf16.msra.mxu0 0
        %808 = vmatprep.subr.bf16.mxu0 0
        %809 = vmatpush1.bf16.msra.mxu0 0
        %810 = vmatprep.subr.bf16.mxu0 0
        %811 = vmatpush1.bf16.msra.mxu0 0
        %812 = vmatprep.subr.bf16.mxu0 0
        %813 = vmatpush1.bf16.msra.mxu0 0
        %814 = vmatprep.subr.bf16.mxu0 0
        %815 = vmatpush1.bf16.msra.mxu0 0
        %816 = vmatprep.subr.bf16.mxu0 0
        %817 = vmatpush1.bf16.msra.mxu0 0
        %818 = vmatprep.subr.bf16.mxu0 0
        %819 = vmatpush1.bf16.msra.mxu0 0
        %820 = vmatprep.subr.bf16.mxu0 0
        %821 = vmatpush1.bf16.msra.mxu0 0
        %822 = vmatprep.subr.bf16.mxu0 0
        %823 = vmatpush1.bf16.msra.mxu0 0
        %824 = vmatprep.subr.bf16.mxu0 0
        %825 = vmatpush1.bf16.msra.mxu0 0
        %826 = vmatprep.subr.bf16.mxu0 0
        %827 = vmatpush1.bf16.msra.mxu0 0
        %828 = vmatprep.subr.bf16.mxu0 0
        %829 = vmatpush1.bf16.msra.mxu0 0
        %830 = vmatprep.mubr.bf16.mxu0 0
        %831 = vmatmul.mubr.bf16.gmra.mrb[0].mxu0 %v796
        %v832 = vpop.f32.mrb[0].mxu0
        %v833 = vadd.f32 0.0, %v832
        %v834 = vpop.f32.mrb[0].mxu0
        %v835 = vpop.f32.mrb[0].mxu0
        %v836 = vadd.f32 0.0, %v835
        %v837 = vpop.f32.mrb[0].mxu0
        %838 = vdwg.mxu0
        %841 = vrot.lane.b32.xlu0 %v833, 112
        %v842 = vpop.permute.xlu0 %841
        %843 = vrot.lane.b32.xlu0 %v836, 112
        %v844 = vpop.permute.xlu0 %843
        %v847 = vcombine.high %v833, 0.0
        %v849 = vunpack.c.l.s4 1983009808
        %v850 = vunpack.c.0.s8 %v849
        %v851 = vlaneseq
        %v852 = vshrl.u32 %v851, 7
        %v853 = vsub.s32 %v850, %v852
        %v854 = vrot.slane %v833, %v853
        %v856 = vunpack.c.l.s4 1983009808
        %v857 = vunpack.c.0.s8 %v856
        %v858 = vlaneseq
        %v859 = vshrl.u32 %v858, 7
        %v860 = vsub.s32 %v857, %v859
        %v861 = vrot.slane %v847, %v860
        %v862 = vcombine.high %v842, 0.0
        %v864 = vunpack.c.l.s4 1983009808
        %v865 = vunpack.c.0.s8 %v864
        %v866 = vlaneseq
        %v867 = vshrl.u32 %v866, 7
        %v868 = vsub.s32 %v865, %v867
        %v869 = vrot.slane %v842, %v868
        %v871 = vunpack.c.l.s4 1983009808
        %v872 = vunpack.c.0.s8 %v871
        %v873 = vlaneseq
        %v874 = vshrl.u32 %v873, 7
        %v875 = vsub.s32 %v872, %v874
        %v876 = vrot.slane %v862, %v875
        %v877 = vcombine.low %v854, %v869
        %v878 = vcombine.high %v854, %v869
        %v880 = vunpack.c.l.s4 1934713408
        %v881 = vunpack.c.0.s8 %v880
        %v882 = vlaneseq
        %v883 = vshrl.u32 %v882, 7
        %v884 = vsub.s32 %v881, %v883
        %v885 = vrot.slane %v877, %v884
        %v887 = vunpack.c.l.s4 1934713408
        %v888 = vunpack.c.0.s8 %v887
        %v889 = vlaneseq
        %v890 = vshrl.u32 %v889, 7
        %v891 = vsub.s32 %v888, %v890
        %v892 = vrot.slane %v878, %v891
        %v893 = vcombine.low %v861, %v876
        %v894 = vcombine.high %v861, %v876
        %v896 = vunpack.c.l.s4 1934713408
        %v897 = vunpack.c.0.s8 %v896
        %v898 = vlaneseq
        %v899 = vshrl.u32 %v898, 7
        %v900 = vsub.s32 %v897, %v899
        %v901 = vrot.slane %v893, %v900
        %v903 = vunpack.c.l.s4 1934713408
        %v904 = vunpack.c.0.s8 %v903
        %v905 = vlaneseq
        %v906 = vshrl.u32 %v905, 7
        %v907 = vsub.s32 %v904, %v906
        %v908 = vrot.slane %v894, %v907
        %v909 = vcombine.high %v885, 0.0
        %v910 = vcombine.high %v892, 0.0
        %v911 = vcombine.high %v901, 0.0
        %v912 = vcombine.high %v908, 0.0
        %v913 = vcombine.high %v836, 0.0
        %v915 = vunpack.c.l.s4 1983009808
        %v916 = vunpack.c.0.s8 %v915
        %v917 = vlaneseq
        %v918 = vshrl.u32 %v917, 7
        %v919 = vsub.s32 %v916, %v918
        %v920 = vrot.slane %v836, %v919
        %v922 = vunpack.c.l.s4 1983009808
        %v923 = vunpack.c.0.s8 %v922
        %v924 = vlaneseq
        %v925 = vshrl.u32 %v924, 7
        %v926 = vsub.s32 %v923, %v925
        %v927 = vrot.slane %v913, %v926
        %v928 = vcombine.high %v844, 0.0
        %v930 = vunpack.c.l.s4 1983009808
        %v931 = vunpack.c.0.s8 %v930
        %v932 = vlaneseq
        %v933 = vshrl.u32 %v932, 7
        %v934 = vsub.s32 %v931, %v933
        %v935 = vrot.slane %v844, %v934
        %v937 = vunpack.c.l.s4 1983009808
        %v938 = vunpack.c.0.s8 %v937
        %v939 = vlaneseq
        %v940 = vshrl.u32 %v939, 7
        %v941 = vsub.s32 %v938, %v940
        %v942 = vrot.slane %v928, %v941
        %v943 = vcombine.low %v920, %v935
        %v944 = vcombine.high %v920, %v935
        %v946 = vunpack.c.l.s4 1934713408
        %v947 = vunpack.c.0.s8 %v946
        %v948 = vlaneseq
        %v949 = vshrl.u32 %v948, 7
        %v950 = vsub.s32 %v947, %v949
        %v951 = vrot.slane %v943, %v950
        %v953 = vunpack.c.l.s4 1934713408
        %v954 = vunpack.c.0.s8 %v953
        %v955 = vlaneseq
        %v956 = vshrl.u32 %v955, 7
        %v957 = vsub.s32 %v954, %v956
        %v958 = vrot.slane %v944, %v957
        %v959 = vcombine.low %v927, %v942
        %v960 = vcombine.high %v927, %v942
        %v962 = vunpack.c.l.s4 1934713408
        %v963 = vunpack.c.0.s8 %v962
        %v964 = vlaneseq
        %v965 = vshrl.u32 %v964, 7
        %v966 = vsub.s32 %v963, %v965
        %v967 = vrot.slane %v959, %v966
        %v969 = vunpack.c.l.s4 1934713408
        %v970 = vunpack.c.0.s8 %v969
        %v971 = vlaneseq
        %v972 = vshrl.u32 %v971, 7
        %v973 = vsub.s32 %v970, %v972
        %v974 = vrot.slane %v960, %v973
        %v975 = vcombine.high %v951, 0.0
        %v976 = vcombine.high %v958, 0.0
        %v977 = vcombine.high %v967, 0.0
        %v978 = vcombine.high %v974, 0.0
        %v979 = vcombine.low %v885, %v892
        %v981 = vunpack.c.l.s4 1983009808
        %v982 = vunpack.c.0.s8 %v981
        %v983 = vlaneseq
        %v984 = vshrl.u32 %v983, 7
        %v985 = vsub.s32 %v982, %v984
        %v986 = vrot.slane %v979, %v985
        %v987 = vcombine.low %v909, %v910
        %v989 = vunpack.c.l.s4 1983009808
        %v990 = vunpack.c.0.s8 %v989
        %v991 = vlaneseq
        %v992 = vshrl.u32 %v991, 7
        %v993 = vsub.s32 %v990, %v992
        %v994 = vrot.slane %v987, %v993
        %v995 = vcombine.low %v901, %v908
        %v997 = vunpack.c.l.s4 1983009808
        %v998 = vunpack.c.0.s8 %v997
        %v999 = vlaneseq
        %v1000 = vshrl.u32 %v999, 7
        %v1001 = vsub.s32 %v998, %v1000
        %v1002 = vrot.slane %v995, %v1001
        %v1003 = vcombine.low %v911, %v912
        %v1005 = vunpack.c.l.s4 1983009808
        %v1006 = vunpack.c.0.s8 %v1005
        %v1007 = vlaneseq
        %v1008 = vshrl.u32 %v1007, 7
        %v1009 = vsub.s32 %v1006, %v1008
        %v1010 = vrot.slane %v1003, %v1009
        %v1011 = vcombine.low %v986, %v994
        %v1013 = vunpack.c.l.s4 1934713408
        %v1014 = vunpack.c.0.s8 %v1013
        %v1015 = vlaneseq
        %v1016 = vshrl.u32 %v1015, 7
        %v1017 = vsub.s32 %v1014, %v1016
        %v1018 = vrot.slane %v1011, %v1017
        %v1019 = vcombine.low %v1002, %v1010
        %v1021 = vunpack.c.l.s4 1934713408
        %v1022 = vunpack.c.0.s8 %v1021
        %v1023 = vlaneseq
        %v1024 = vshrl.u32 %v1023, 7
        %v1025 = vsub.s32 %v1022, %v1024
        %v1026 = vrot.slane %v1019, %v1025
        %v1027 = vcombine.low %v1018, %v1026
        %v1028 = vcombine.high %v1018, %v1026
        %v1029 = vcombine.low %v951, %v958
        %v1031 = vunpack.c.l.s4 1983009808
        %v1032 = vunpack.c.0.s8 %v1031
        %v1033 = vlaneseq
        %v1034 = vshrl.u32 %v1033, 7
        %v1035 = vsub.s32 %v1032, %v1034
        %v1036 = vrot.slane %v1029, %v1035
        %v1037 = vcombine.low %v975, %v976
        %v1039 = vunpack.c.l.s4 1983009808
        %v1040 = vunpack.c.0.s8 %v1039
        %v1041 = vlaneseq
        %v1042 = vshrl.u32 %v1041, 7
        %v1043 = vsub.s32 %v1040, %v1042
        %v1044 = vrot.slane %v1037, %v1043
        %v1045 = vcombine.low %v967, %v974
        %v1047 = vunpack.c.l.s4 1983009808
        %v1048 = vunpack.c.0.s8 %v1047
        %v1049 = vlaneseq
        %v1050 = vshrl.u32 %v1049, 7
        %v1051 = vsub.s32 %v1048, %v1050
        %v1052 = vrot.slane %v1045, %v1051
        %v1053 = vcombine.low %v977, %v978
        %v1055 = vunpack.c.l.s4 1983009808
        %v1056 = vunpack.c.0.s8 %v1055
        %v1057 = vlaneseq
        %v1058 = vshrl.u32 %v1057, 7
        %v1059 = vsub.s32 %v1056, %v1058
        %v1060 = vrot.slane %v1053, %v1059
        %v1061 = vcombine.low %v1036, %v1044
        %v1063 = vunpack.c.l.s4 1934713408
        %v1064 = vunpack.c.0.s8 %v1063
        %v1065 = vlaneseq
        %v1066 = vshrl.u32 %v1065, 7
        %v1067 = vsub.s32 %v1064, %v1066
        %v1068 = vrot.slane %v1061, %v1067
        %v1069 = vcombine.low %v1052, %v1060
        %v1071 = vunpack.c.l.s4 1934713408
        %v1072 = vunpack.c.0.s8 %v1071
        %v1073 = vlaneseq
        %v1074 = vshrl.u32 %v1073, 7
        %v1075 = vsub.s32 %v1072, %v1074
        %v1076 = vrot.slane %v1069, %v1075
        %v1077 = vcombine.low %v1068, %v1076
        %v1078 = vcombine.high %v1068, %v1076
        %v1079 = vpack.c.bf16 %v1027, %v1027
        %v1080 = vpack.c.bf16 %v1028, %v1028
        %v1081 = vpack.c.bf16 %v1077, %v1077
        %v1082 = vpack.c.bf16 %v1078, %v1078
        %1083 = vrot.lane.b32.xlu0 %v833, 96
        %v1084 = vpop.permute.xlu0 %1083
        %1085 = vrot.lane.b32.xlu0 %v836, 96
        %v1086 = vpop.permute.xlu0 %1085
        %1087 = vrot.lane.b32.xlu0 %v842, 96
        %v1088 = vpop.permute.xlu0 %1087
        %1089 = vrot.lane.b32.xlu0 %v844, 96
        %v1090 = vpop.permute.xlu0 %1089
        %v1095 = vcombine.high %v1084, 0.0
        %v1097 = vunpack.c.l.s4 1983009808
        %v1098 = vunpack.c.0.s8 %v1097
        %v1099 = vlaneseq
        %v1100 = vshrl.u32 %v1099, 7
        %v1101 = vsub.s32 %v1098, %v1100
        %v1102 = vrot.slane %v1084, %v1101
        %v1104 = vunpack.c.l.s4 1983009808
        %v1105 = vunpack.c.0.s8 %v1104
        %v1106 = vlaneseq
        %v1107 = vshrl.u32 %v1106, 7
        %v1108 = vsub.s32 %v1105, %v1107
        %v1109 = vrot.slane %v1095, %v1108
        %v1110 = vcombine.high %v1088, 0.0
        %v1112 = vunpack.c.l.s4 1983009808
        %v1113 = vunpack.c.0.s8 %v1112
        %v1114 = vlaneseq
        %v1115 = vshrl.u32 %v1114, 7
        %v1116 = vsub.s32 %v1113, %v1115
        %v1117 = vrot.slane %v1088, %v1116
        %v1119 = vunpack.c.l.s4 1983009808
        %v1120 = vunpack.c.0.s8 %v1119
        %v1121 = vlaneseq
        %v1122 = vshrl.u32 %v1121, 7
        %v1123 = vsub.s32 %v1120, %v1122
        %v1124 = vrot.slane %v1110, %v1123
        %v1125 = vcombine.low %v1102, %v1117
        %v1126 = vcombine.high %v1102, %v1117
        %v1128 = vunpack.c.l.s4 1934713408
        %v1129 = vunpack.c.0.s8 %v1128
        %v1130 = vlaneseq
        %v1131 = vshrl.u32 %v1130, 7
        %v1132 = vsub.s32 %v1129, %v1131
        %v1133 = vrot.slane %v1125, %v1132
        %v1135 = vunpack.c.l.s4 1934713408
        %v1136 = vunpack.c.0.s8 %v1135
        %v1137 = vlaneseq
        %v1138 = vshrl.u32 %v1137, 7
        %v1139 = vsub.s32 %v1136, %v1138
        %v1140 = vrot.slane %v1126, %v1139
        %v1141 = vcombine.low %v1109, %v1124
        %v1142 = vcombine.high %v1109, %v1124
        %v1144 = vunpack.c.l.s4 1934713408
        %v1145 = vunpack.c.0.s8 %v1144
        %v1146 = vlaneseq
        %v1147 = vshrl.u32 %v1146, 7
        %v1148 = vsub.s32 %v1145, %v1147
        %v1149 = vrot.slane %v1141, %v1148
        %v1151 = vunpack.c.l.s4 1934713408
        %v1152 = vunpack.c.0.s8 %v1151
        %v1153 = vlaneseq
        %v1154 = vshrl.u32 %v1153, 7
        %v1155 = vsub.s32 %v1152, %v1154
        %v1156 = vrot.slane %v1142, %v1155
        %v1157 = vcombine.high %v1133, 0.0
        %v1158 = vcombine.high %v1140, 0.0
        %v1159 = vcombine.high %v1149, 0.0
        %v1160 = vcombine.high %v1156, 0.0
        %v1161 = vcombine.high %v1086, 0.0
        %v1163 = vunpack.c.l.s4 1983009808
        %v1164 = vunpack.c.0.s8 %v1163
        %v1165 = vlaneseq
        %v1166 = vshrl.u32 %v1165, 7
        %v1167 = vsub.s32 %v1164, %v1166
        %v1168 = vrot.slane %v1086, %v1167
        %v1170 = vunpack.c.l.s4 1983009808
        %v1171 = vunpack.c.0.s8 %v1170
        %v1172 = vlaneseq
        %v1173 = vshrl.u32 %v1172, 7
        %v1174 = vsub.s32 %v1171, %v1173
        %v1175 = vrot.slane %v1161, %v1174
        %v1176 = vcombine.high %v1090, 0.0
        %v1178 = vunpack.c.l.s4 1983009808
        %v1179 = vunpack.c.0.s8 %v1178
        %v1180 = vlaneseq
        %v1181 = vshrl.u32 %v1180, 7
        %v1182 = vsub.s32 %v1179, %v1181
        %v1183 = vrot.slane %v1090, %v1182
        %v1185 = vunpack.c.l.s4 1983009808
        %v1186 = vunpack.c.0.s8 %v1185
        %v1187 = vlaneseq
        %v1188 = vshrl.u32 %v1187, 7
        %v1189 = vsub.s32 %v1186, %v1188
        %v1190 = vrot.slane %v1176, %v1189
        %v1191 = vcombine.low %v1168, %v1183
        %v1192 = vcombine.high %v1168, %v1183
        %v1194 = vunpack.c.l.s4 1934713408
        %v1195 = vunpack.c.0.s8 %v1194
        %v1196 = vlaneseq
        %v1197 = vshrl.u32 %v1196, 7
        %v1198 = vsub.s32 %v1195, %v1197
        %v1199 = vrot.slane %v1191, %v1198
        %v1201 = vunpack.c.l.s4 1934713408
        %v1202 = vunpack.c.0.s8 %v1201
        %v1203 = vlaneseq
        %v1204 = vshrl.u32 %v1203, 7
        %v1205 = vsub.s32 %v1202, %v1204
        %v1206 = vrot.slane %v1192, %v1205
        %v1207 = vcombine.low %v1175, %v1190
        %v1208 = vcombine.high %v1175, %v1190
        %v1210 = vunpack.c.l.s4 1934713408
        %v1211 = vunpack.c.0.s8 %v1210
        %v1212 = vlaneseq
        %v1213 = vshrl.u32 %v1212, 7
        %v1214 = vsub.s32 %v1211, %v1213
        %v1215 = vrot.slane %v1207, %v1214
        %v1217 = vunpack.c.l.s4 1934713408
        %v1218 = vunpack.c.0.s8 %v1217
        %v1219 = vlaneseq
        %v1220 = vshrl.u32 %v1219, 7
        %v1221 = vsub.s32 %v1218, %v1220
        %v1222 = vrot.slane %v1208, %v1221
        %v1223 = vcombine.high %v1199, 0.0
        %v1224 = vcombine.high %v1206, 0.0
        %v1225 = vcombine.high %v1215, 0.0
        %v1226 = vcombine.high %v1222, 0.0
        %v1227 = vcombine.low %v1133, %v1140
        %v1229 = vunpack.c.l.s4 1983009808
        %v1230 = vunpack.c.0.s8 %v1229
        %v1231 = vlaneseq
        %v1232 = vshrl.u32 %v1231, 7
        %v1233 = vsub.s32 %v1230, %v1232
        %v1234 = vrot.slane %v1227, %v1233
        %v1235 = vcombine.low %v1157, %v1158
        %v1237 = vunpack.c.l.s4 1983009808
        %v1238 = vunpack.c.0.s8 %v1237
        %v1239 = vlaneseq
        %v1240 = vshrl.u32 %v1239, 7
        %v1241 = vsub.s32 %v1238, %v1240
        %v1242 = vrot.slane %v1235, %v1241
        %v1243 = vcombine.low %v1149, %v1156
        %v1245 = vunpack.c.l.s4 1983009808
        %v1246 = vunpack.c.0.s8 %v1245
        %v1247 = vlaneseq
        %v1248 = vshrl.u32 %v1247, 7
        %v1249 = vsub.s32 %v1246, %v1248
        %v1250 = vrot.slane %v1243, %v1249
        %v1251 = vcombine.low %v1159, %v1160
        %v1253 = vunpack.c.l.s4 1983009808
        %v1254 = vunpack.c.0.s8 %v1253
        %v1255 = vlaneseq
        %v1256 = vshrl.u32 %v1255, 7
        %v1257 = vsub.s32 %v1254, %v1256
        %v1258 = vrot.slane %v1251, %v1257
        %v1259 = vcombine.low %v1234, %v1242
        %v1261 = vunpack.c.l.s4 1934713408
        %v1262 = vunpack.c.0.s8 %v1261
        %v1263 = vlaneseq
        %v1264 = vshrl.u32 %v1263, 7
        %v1265 = vsub.s32 %v1262, %v1264
        %v1266 = vrot.slane %v1259, %v1265
        %v1267 = vcombine.low %v1250, %v1258
        %v1269 = vunpack.c.l.s4 1934713408
        %v1270 = vunpack.c.0.s8 %v1269
        %v1271 = vlaneseq
        %v1272 = vshrl.u32 %v1271, 7
        %v1273 = vsub.s32 %v1270, %v1272
        %v1274 = vrot.slane %v1267, %v1273
        %v1275 = vcombine.low %v1266, %v1274
        %v1276 = vcombine.high %v1266, %v1274
        %v1277 = vcombine.low %v1199, %v1206
        %v1279 = vunpack.c.l.s4 1983009808
        %v1280 = vunpack.c.0.s8 %v1279
        %v1281 = vlaneseq
        %v1282 = vshrl.u32 %v1281, 7
        %v1283 = vsub.s32 %v1280, %v1282
        %v1284 = vrot.slane %v1277, %v1283
        %v1285 = vcombine.low %v1223, %v1224
        %v1287 = vunpack.c.l.s4 1983009808
        %v1288 = vunpack.c.0.s8 %v1287
        %v1289 = vlaneseq
        %v1290 = vshrl.u32 %v1289, 7
        %v1291 = vsub.s32 %v1288, %v1290
        %v1292 = vrot.slane %v1285, %v1291
        %v1293 = vcombine.low %v1215, %v1222
        %v1295 = vunpack.c.l.s4 1983009808
        %v1296 = vunpack.c.0.s8 %v1295
        %v1297 = vlaneseq
        %v1298 = vshrl.u32 %v1297, 7
        %v1299 = vsub.s32 %v1296, %v1298
        %v1300 = vrot.slane %v1293, %v1299
        %v1301 = vcombine.low %v1225, %v1226
        %v1303 = vunpack.c.l.s4 1983009808
        %v1304 = vunpack.c.0.s8 %v1303
        %v1305 = vlaneseq
        %v1306 = vshrl.u32 %v1305, 7
        %v1307 = vsub.s32 %v1304, %v1306
        %v1308 = vrot.slane %v1301, %v1307
        %v1309 = vcombine.low %v1284, %v1292
        %v1311 = vunpack.c.l.s4 1934713408
        %v1312 = vunpack.c.0.s8 %v1311
        %v1313 = vlaneseq
        %v1314 = vshrl.u32 %v1313, 7
        %v1315 = vsub.s32 %v1312, %v1314
        %v1316 = vrot.slane %v1309, %v1315
        %v1317 = vcombine.low %v1300, %v1308
        %v1319 = vunpack.c.l.s4 1934713408
        %v1320 = vunpack.c.0.s8 %v1319
        %v1321 = vlaneseq
        %v1322 = vshrl.u32 %v1321, 7
        %v1323 = vsub.s32 %v1320, %v1322
        %v1324 = vrot.slane %v1317, %v1323
        %v1325 = vcombine.low %v1316, %v1324
        %v1326 = vcombine.high %v1316, %v1324
        %v1327 = vpack.c.bf16 %v1275, %v1275
        %v1328 = vpack.c.bf16 %v1276, %v1276
        %v1329 = vpack.c.bf16 %v1325, %v1325
        %v1330 = vpack.c.bf16 %v1326, %v1326
        %1331 = vrot.lane.b32.xlu0 %v833, 64
        %v1332 = vpop.permute.xlu0 %1331
        %1333 = vrot.lane.b32.xlu0 %v836, 64
        %v1334 = vpop.permute.xlu0 %1333
        %1335 = vrot.lane.b32.xlu0 %v842, 64
        %v1336 = vpop.permute.xlu0 %1335
        %1337 = vrot.lane.b32.xlu0 %v844, 64
        %v1338 = vpop.permute.xlu0 %1337
        %v1343 = vcombine.high %v1332, 0.0
        %v1345 = vunpack.c.l.s4 1983009808
        %v1346 = vunpack.c.0.s8 %v1345
        %v1347 = vlaneseq
        %v1348 = vshrl.u32 %v1347, 7
        %v1349 = vsub.s32 %v1346, %v1348
        %v1350 = vrot.slane %v1332, %v1349
        %v1352 = vunpack.c.l.s4 1983009808
        %v1353 = vunpack.c.0.s8 %v1352
        %v1354 = vlaneseq
        %v1355 = vshrl.u32 %v1354, 7
        %v1356 = vsub.s32 %v1353, %v1355
        %v1357 = vrot.slane %v1343, %v1356
        %v1358 = vcombine.high %v1336, 0.0
        %v1360 = vunpack.c.l.s4 1983009808
        %v1361 = vunpack.c.0.s8 %v1360
        %v1362 = vlaneseq
        %v1363 = vshrl.u32 %v1362, 7
        %v1364 = vsub.s32 %v1361, %v1363
        %v1365 = vrot.slane %v1336, %v1364
        %v1367 = vunpack.c.l.s4 1983009808
        %v1368 = vunpack.c.0.s8 %v1367
        %v1369 = vlaneseq
        %v1370 = vshrl.u32 %v1369, 7
        %v1371 = vsub.s32 %v1368, %v1370
        %v1372 = vrot.slane %v1358, %v1371
        %v1373 = vcombine.low %v1350, %v1365
        %v1374 = vcombine.high %v1350, %v1365
        %v1376 = vunpack.c.l.s4 1934713408
        %v1377 = vunpack.c.0.s8 %v1376
        %v1378 = vlaneseq
        %v1379 = vshrl.u32 %v1378, 7
        %v1380 = vsub.s32 %v1377, %v1379
        %v1381 = vrot.slane %v1373, %v1380
        %v1383 = vunpack.c.l.s4 1934713408
        %v1384 = vunpack.c.0.s8 %v1383
        %v1385 = vlaneseq
        %v1386 = vshrl.u32 %v1385, 7
        %v1387 = vsub.s32 %v1384, %v1386
        %v1388 = vrot.slane %v1374, %v1387
        %v1389 = vcombine.low %v1357, %v1372
        %v1390 = vcombine.high %v1357, %v1372
        %v1392 = vunpack.c.l.s4 1934713408
        %v1393 = vunpack.c.0.s8 %v1392
        %v1394 = vlaneseq
        %v1395 = vshrl.u32 %v1394, 7
        %v1396 = vsub.s32 %v1393, %v1395
        %v1397 = vrot.slane %v1389, %v1396
        %v1399 = vunpack.c.l.s4 1934713408
        %v1400 = vunpack.c.0.s8 %v1399
        %v1401 = vlaneseq
        %v1402 = vshrl.u32 %v1401, 7
        %v1403 = vsub.s32 %v1400, %v1402
        %v1404 = vrot.slane %v1390, %v1403
        %v1405 = vcombine.high %v1381, 0.0
        %v1406 = vcombine.high %v1388, 0.0
        %v1407 = vcombine.high %v1397, 0.0
        %v1408 = vcombine.high %v1404, 0.0
        %v1409 = vcombine.high %v1334, 0.0
        %v1411 = vunpack.c.l.s4 1983009808
        %v1412 = vunpack.c.0.s8 %v1411
        %v1413 = vlaneseq
        %v1414 = vshrl.u32 %v1413, 7
        %v1415 = vsub.s32 %v1412, %v1414
        %v1416 = vrot.slane %v1334, %v1415
        %v1418 = vunpack.c.l.s4 1983009808
        %v1419 = vunpack.c.0.s8 %v1418
        %v1420 = vlaneseq
        %v1421 = vshrl.u32 %v1420, 7
        %v1422 = vsub.s32 %v1419, %v1421
        %v1423 = vrot.slane %v1409, %v1422
        %v1424 = vcombine.high %v1338, 0.0
        %v1426 = vunpack.c.l.s4 1983009808
        %v1427 = vunpack.c.0.s8 %v1426
        %v1428 = vlaneseq
        %v1429 = vshrl.u32 %v1428, 7
        %v1430 = vsub.s32 %v1427, %v1429
        %v1431 = vrot.slane %v1338, %v1430
        %v1433 = vunpack.c.l.s4 1983009808
        %v1434 = vunpack.c.0.s8 %v1433
        %v1435 = vlaneseq
        %v1436 = vshrl.u32 %v1435, 7
        %v1437 = vsub.s32 %v1434, %v1436
        %v1438 = vrot.slane %v1424, %v1437
        %v1439 = vcombine.low %v1416, %v1431
        %v1440 = vcombine.high %v1416, %v1431
        %v1442 = vunpack.c.l.s4 1934713408
        %v1443 = vunpack.c.0.s8 %v1442
        %v1444 = vlaneseq
        %v1445 = vshrl.u32 %v1444, 7
        %v1446 = vsub.s32 %v1443, %v1445
        %v1447 = vrot.slane %v1439, %v1446
        %v1449 = vunpack.c.l.s4 1934713408
        %v1450 = vunpack.c.0.s8 %v1449
        %v1451 = vlaneseq
        %v1452 = vshrl.u32 %v1451, 7
        %v1453 = vsub.s32 %v1450, %v1452
        %v1454 = vrot.slane %v1440, %v1453
        %v1455 = vcombine.low %v1423, %v1438
        %v1456 = vcombine.high %v1423, %v1438
        %v1458 = vunpack.c.l.s4 1934713408
        %v1459 = vunpack.c.0.s8 %v1458
        %v1460 = vlaneseq
        %v1461 = vshrl.u32 %v1460, 7
        %v1462 = vsub.s32 %v1459, %v1461
        %v1463 = vrot.slane %v1455, %v1462
        %v1465 = vunpack.c.l.s4 1934713408
        %v1466 = vunpack.c.0.s8 %v1465
        %v1467 = vlaneseq
        %v1468 = vshrl.u32 %v1467, 7
        %v1469 = vsub.s32 %v1466, %v1468
        %v1470 = vrot.slane %v1456, %v1469
        %v1471 = vcombine.high %v1447, 0.0
        %v1472 = vcombine.high %v1454, 0.0
        %v1473 = vcombine.high %v1463, 0.0
        %v1474 = vcombine.high %v1470, 0.0
        %v1475 = vcombine.low %v1381, %v1388
        %v1477 = vunpack.c.l.s4 1983009808
        %v1478 = vunpack.c.0.s8 %v1477
        %v1479 = vlaneseq
        %v1480 = vshrl.u32 %v1479, 7
        %v1481 = vsub.s32 %v1478, %v1480
        %v1482 = vrot.slane %v1475, %v1481
        %v1483 = vcombine.low %v1405, %v1406
        %v1485 = vunpack.c.l.s4 1983009808
        %v1486 = vunpack.c.0.s8 %v1485
        %v1487 = vlaneseq
        %v1488 = vshrl.u32 %v1487, 7
        %v1489 = vsub.s32 %v1486, %v1488
        %v1490 = vrot.slane %v1483, %v1489
        %v1491 = vcombine.low %v1397, %v1404
        %v1493 = vunpack.c.l.s4 1983009808
        %v1494 = vunpack.c.0.s8 %v1493
        %v1495 = vlaneseq
        %v1496 = vshrl.u32 %v1495, 7
        %v1497 = vsub.s32 %v1494, %v1496
        %v1498 = vrot.slane %v1491, %v1497
        %v1499 = vcombine.low %v1407, %v1408
        %v1501 = vunpack.c.l.s4 1983009808
        %v1502 = vunpack.c.0.s8 %v1501
        %v1503 = vlaneseq
        %v1504 = vshrl.u32 %v1503, 7
        %v1505 = vsub.s32 %v1502, %v1504
        %v1506 = vrot.slane %v1499, %v1505
        %v1507 = vcombine.low %v1482, %v1490
        %v1509 = vunpack.c.l.s4 1934713408
        %v1510 = vunpack.c.0.s8 %v1509
        %v1511 = vlaneseq
        %v1512 = vshrl.u32 %v1511, 7
        %v1513 = vsub.s32 %v1510, %v1512
        %v1514 = vrot.slane %v1507, %v1513
        %v1515 = vcombine.low %v1498, %v1506
        %v1517 = vunpack.c.l.s4 1934713408
        %v1518 = vunpack.c.0.s8 %v1517
        %v1519 = vlaneseq
        %v1520 = vshrl.u32 %v1519, 7
        %v1521 = vsub.s32 %v1518, %v1520
        %v1522 = vrot.slane %v1515, %v1521
        %v1523 = vcombine.low %v1514, %v1522
        %v1524 = vcombine.high %v1514, %v1522
        %v1525 = vcombine.low %v1447, %v1454
        %v1527 = vunpack.c.l.s4 1983009808
        %v1528 = vunpack.c.0.s8 %v1527
        %v1529 = vlaneseq
        %v1530 = vshrl.u32 %v1529, 7
        %v1531 = vsub.s32 %v1528, %v1530
        %v1532 = vrot.slane %v1525, %v1531
        %v1533 = vcombine.low %v1471, %v1472
        %v1535 = vunpack.c.l.s4 1983009808
        %v1536 = vunpack.c.0.s8 %v1535
        %v1537 = vlaneseq
        %v1538 = vshrl.u32 %v1537, 7
        %v1539 = vsub.s32 %v1536, %v1538
        %v1540 = vrot.slane %v1533, %v1539
        %v1541 = vcombine.low %v1463, %v1470
        %v1543 = vunpack.c.l.s4 1983009808
        %v1544 = vunpack.c.0.s8 %v1543
        %v1545 = vlaneseq
        %v1546 = vshrl.u32 %v1545, 7
        %v1547 = vsub.s32 %v1544, %v1546
        %v1548 = vrot.slane %v1541, %v1547
        %v1549 = vcombine.low %v1473, %v1474
        %v1551 = vunpack.c.l.s4 1983009808
        %v1552 = vunpack.c.0.s8 %v1551
        %v1553 = vlaneseq
        %v1554 = vshrl.u32 %v1553, 7
        %v1555 = vsub.s32 %v1552, %v1554
        %v1556 = vrot.slane %v1549, %v1555
        %v1557 = vcombine.low %v1532, %v1540
        %v1559 = vunpack.c.l.s4 1934713408
        %v1560 = vunpack.c.0.s8 %v1559
        %v1561 = vlaneseq
        %v1562 = vshrl.u32 %v1561, 7
        %v1563 = vsub.s32 %v1560, %v1562
        %v1564 = vrot.slane %v1557, %v1563
        %v1565 = vcombine.low %v1548, %v1556
        %v1567 = vunpack.c.l.s4 1934713408
        %v1568 = vunpack.c.0.s8 %v1567
        %v1569 = vlaneseq
        %v1570 = vshrl.u32 %v1569, 7
        %v1571 = vsub.s32 %v1568, %v1570
        %v1572 = vrot.slane %v1565, %v1571
        %v1573 = vcombine.low %v1564, %v1572
        %v1574 = vcombine.high %v1564, %v1572
        %v1575 = vpack.c.bf16 %v1523, %v1523
        %v1576 = vpack.c.bf16 %v1524, %v1524
        %v1577 = vpack.c.bf16 %v1573, %v1573
        %v1578 = vpack.c.bf16 %v1574, %v1574
        %v1579 = vld [vmem:[%s1] sm:$0xff]
        %vm1580 = vcmask 130048
        %v1582 = vsel %vm1580, %v1079, 0
        %v1585 = vsel %vm1580, %v1327, 0
        %1587 = vmatprep.subr.bf16.mxu0 0
        %1588 = vmatpush1.bf16.xpose.msra.mxu0 %v1585
        %1589 = vmatprep.subr.bf16.mxu0 0
        %1590 = vmatpush1.bf16.xpose.msra.mxu0 0
        %1591 = vmatprep.subr.bf16.mxu0 0
        %1592 = vmatpush1.bf16.xpose.msra.mxu0 0
        %1593 = vmatprep.subr.bf16.mxu0 0
        %1594 = vmatpush1.bf16.xpose.msra.mxu0 0
        %1595 = vmatprep.subr.bf16.mxu0 0
        %1596 = vmatpush1.bf16.xpose.msra.mxu0 0
        %1597 = vmatprep.subr.bf16.mxu0 0
        %1598 = vmatpush1.bf16.xpose.msra.mxu0 0
        %1599 = vmatprep.subr.bf16.mxu0 0
        %1600 = vmatpush1.bf16.xpose.msra.mxu0 0
        %1601 = vmatprep.subr.bf16.mxu0 0
        %1602 = vmatpush1.bf16.xpose.msra.mxu0 0
        %1603 = vmatprep.subr.bf16.mxu0 0
        %1604 = vmatpush1.bf16.xpose.msra.mxu0 0
        %1605 = vmatprep.subr.bf16.mxu0 0
        %1606 = vmatpush1.bf16.xpose.msra.mxu0 0
        %1607 = vmatprep.subr.bf16.mxu0 0
        %1608 = vmatpush1.bf16.xpose.msra.mxu0 0
        %1609 = vmatprep.subr.bf16.mxu0 0
        %1610 = vmatpush1.bf16.xpose.msra.mxu0 0
        %1611 = vmatprep.subr.bf16.mxu0 0
        %1612 = vmatpush1.bf16.xpose.msra.mxu0 0
        %1613 = vmatprep.subr.bf16.mxu0 0
        %1614 = vmatpush1.bf16.xpose.msra.mxu0 0
        %1615 = vmatprep.subr.bf16.mxu0 0
        %1616 = vmatpush1.bf16.xpose.msra.mxu0 0
        %1617 = vmatprep.subr.bf16.mxu0 0
        %1618 = vmatpush1.bf16.xpose.msra.mxu0 0
        %1619 = vmatprep.mubr.bf16.mxu0 0
        %1620 = vmatmul.mubr.bf16.gmra.mrb[0].mxu0 %v1582
        %v1621 = vpop.f32.mrb[0].mxu0
        %v1622 = vadd.f32 %v1579, %v1621
        %v1623 = vpop.f32.mrb[0].mxu0
        %v1624 = vpop.f32.mrb[0].mxu0
        %v1625 = vpop.f32.mrb[0].mxu0
        %1626 = vdwg.mxu0
        %v1628 = vsel %vm1580, %v1080, 0
        %v1631 = vsel %vm1580, %v1328, 0
        %1633 = vmatprep.subr.bf16.mxu0 0
        %1634 = vmatpush1.bf16.xpose.msra.mxu0 %v1631
        %1635 = vmatprep.subr.bf16.mxu0 0
        %1636 = vmatpush1.bf16.xpose.msra.mxu0 0
        %1637 = vmatprep.subr.bf16.mxu0 0
        %1638 = vmatpush1.bf16.xpose.msra.mxu0 0
        %1639 = vmatprep.subr.bf16.mxu0 0
        %1640 = vmatpush1.bf16.xpose.msra.mxu0 0
        %1641 = vmatprep.subr.bf16.mxu0 0
        %1642 = vmatpush1.bf16.xpose.msra.mxu0 0
        %1643 = vmatprep.subr.bf16.mxu0 0
        %1644 = vmatpush1.bf16.xpose.msra.mxu0 0
        %1645 = vmatprep.subr.bf16.mxu0 0
        %1646 = vmatpush1.bf16.xpose.msra.mxu0 0
        %1647 = vmatprep.subr.bf16.mxu0 0
        %1648 = vmatpush1.bf16.xpose.msra.mxu0 0
        %1649 = vmatprep.subr.bf16.mxu0 0
        %1650 = vmatpush1.bf16.xpose.msra.mxu0 0
        %1651 = vmatprep.subr.bf16.mxu0 0
        %1652 = vmatpush1.bf16.xpose.msra.mxu0 0
        %1653 = vmatprep.subr.bf16.mxu0 0
        %1654 = vmatpush1.bf16.xpose.msra.mxu0 0
        %1655 = vmatprep.subr.bf16.mxu0 0
        %1656 = vmatpush1.bf16.xpose.msra.mxu0 0
        %1657 = vmatprep.subr.bf16.mxu0 0
        %1658 = vmatpush1.bf16.xpose.msra.mxu0 0
        %1659 = vmatprep.subr.bf16.mxu0 0
        %1660 = vmatpush1.bf16.xpose.msra.mxu0 0
        %1661 = vmatprep.subr.bf16.mxu0 0
        %1662 = vmatpush1.bf16.xpose.msra.mxu0 0
        %1663 = vmatprep.subr.bf16.mxu0 0
        %1664 = vmatpush1.bf16.xpose.msra.mxu0 0
        %1665 = vmatprep.mubr.bf16.mxu0 0
        %1666 = vmatmul.mubr.bf16.gmra.mrb[0].mxu0 %v1628
        %v1667 = vpop.f32.mrb[0].mxu0
        %v1668 = vadd.f32 %v1579, %v1667
        %v1669 = vpop.f32.mrb[0].mxu0
        %v1670 = vpop.f32.mrb[0].mxu0
        %v1671 = vpop.f32.mrb[0].mxu0
        %1672 = vdwg.mxu0
        %v1674 = vsel %vm1580, %v1081, 0
        %v1677 = vsel %vm1580, %v1329, 0
        %1679 = vmatprep.subr.bf16.mxu0 0
        %1680 = vmatpush1.bf16.xpose.msra.mxu0 %v1677
        %1681 = vmatprep.subr.bf16.mxu0 0
        %1682 = vmatpush1.bf16.xpose.msra.mxu0 0
        %1683 = vmatprep.subr.bf16.mxu0 0
        %1684 = vmatpush1.bf16.xpose.msra.mxu0 0
        %1685 = vmatprep.subr.bf16.mxu0 0
        %1686 = vmatpush1.bf16.xpose.msra.mxu0 0
        %1687 = vmatprep.subr.bf16.mxu0 0
        %1688 = vmatpush1.bf16.xpose.msra.mxu0 0
        %1689 = vmatprep.subr.bf16.mxu0 0
        %1690 = vmatpush1.bf16.xpose.msra.mxu0 0
        %1691 = vmatprep.subr.bf16.mxu0 0
        %1692 = vmatpush1.bf16.xpose.msra.mxu0 0
        %1693 = vmatprep.subr.bf16.mxu0 0
        %1694 = vmatpush1.bf16.xpose.msra.mxu0 0
        %1695 = vmatprep.subr.bf16.mxu0 0
        %1696 = vmatpush1.bf16.xpose.msra.mxu0 0
        %1697 = vmatprep.subr.bf16.mxu0 0
        %1698 = vmatpush1.bf16.xpose.msra.mxu0 0
        %1699 = vmatprep.subr.bf16.mxu0 0
        %1700 = vmatpush1.bf16.xpose.msra.mxu0 0
        %1701 = vmatprep.subr.bf16.mxu0 0
        %1702 = vmatpush1.bf16.xpose.msra.mxu0 0
        %1703 = vmatprep.subr.bf16.mxu0 0
        %1704 = vmatpush1.bf16.xpose.msra.mxu0 0
        %1705 = vmatprep.subr.bf16.mxu0 0
        %1706 = vmatpush1.bf16.xpose.msra.mxu0 0
        %1707 = vmatprep.subr.bf16.mxu0 0
        %1708 = vmatpush1.bf16.xpose.msra.mxu0 0
        %1709 = vmatprep.subr.bf16.mxu0 0
        %1710 = vmatpush1.bf16.xpose.msra.mxu0 0
        %1711 = vmatprep.mubr.bf16.mxu0 0
        %1712 = vmatmul.mubr.bf16.gmra.mrb[0].mxu0 %v1674
        %v1713 = vpop.f32.mrb[0].mxu0
        %v1714 = vadd.f32 %v1579, %v1713
        %v1715 = vpop.f32.mrb[0].mxu0
        %v1716 = vpop.f32.mrb[0].mxu0
        %v1717 = vpop.f32.mrb[0].mxu0
        %1718 = vdwg.mxu0
        %v1720 = vsel %vm1580, %v1082, 0
        %v1723 = vsel %vm1580, %v1330, 0
        %1725 = vmatprep.subr.bf16.mxu0 0
        %1726 = vmatpush1.bf16.xpose.msra.mxu0 %v1723
        %1727 = vmatprep.subr.bf16.mxu0 0
        %1728 = vmatpush1.bf16.xpose.msra.mxu0 0
        %1729 = vmatprep.subr.bf16.mxu0 0
        %1730 = vmatpush1.bf16.xpose.msra.mxu0 0
        %1731 = vmatprep.subr.bf16.mxu0 0
        %1732 = vmatpush1.bf16.xpose.msra.mxu0 0
        %1733 = vmatprep.subr.bf16.mxu0 0
        %1734 = vmatpush1.bf16.xpose.msra.mxu0 0
        %1735 = vmatprep.subr.bf16.mxu0 0
        %1736 = vmatpush1.bf16.xpose.msra.mxu0 0
        %1737 = vmatprep.subr.bf16.mxu0 0
        %1738 = vmatpush1.bf16.xpose.msra.mxu0 0
        %1739 = vmatprep.subr.bf16.mxu0 0
        %1740 = vmatpush1.bf16.xpose.msra.mxu0 0
        %1741 = vmatprep.subr.bf16.mxu0 0
        %1742 = vmatpush1.bf16.xpose.msra.mxu0 0
        %1743 = vmatprep.subr.bf16.mxu0 0
        %1744 = vmatpush1.bf16.xpose.msra.mxu0 0
        %1745 = vmatprep.subr.bf16.mxu0 0
        %1746 = vmatpush1.bf16.xpose.msra.mxu0 0
        %1747 = vmatprep.subr.bf16.mxu0 0
        %1748 = vmatpush1.bf16.xpose.msra.mxu0 0
        %1749 = vmatprep.subr.bf16.mxu0 0
        %1750 = vmatpush1.bf16.xpose.msra.mxu0 0
        %1751 = vmatprep.subr.bf16.mxu0 0
        %1752 = vmatpush1.bf16.xpose.msra.mxu0 0
        %1753 = vmatprep.subr.bf16.mxu0 0
        %1754 = vmatpush1.bf16.xpose.msra.mxu0 0
        %1755 = vmatprep.subr.bf16.mxu0 0
        %1756 = vmatpush1.bf16.xpose.msra.mxu0 0
        %1757 = vmatprep.mubr.bf16.mxu0 0
        %1758 = vmatmul.mubr.bf16.gmra.mrb[0].mxu0 %v1720
        %v1759 = vpop.f32.mrb[0].mxu0
        %v1760 = vadd.f32 %v1579, %v1759
        %v1761 = vpop.f32.mrb[0].mxu0
        %v1762 = vpop.f32.mrb[0].mxu0
        %v1763 = vpop.f32.mrb[0].mxu0
        %1764 = vdwg.mxu0
        %vm1765 = vcmask 64512
        %v1766 = vsel %vm1765, %v1622, -inf
        %1767 = vmax.xlane.f32.xlu0 %v1766
        %v1768 = vpop.xlane.xlu0 %1767
        %v1769 = vsel %vm1765, %v1668, -inf
        %1770 = vmax.xlane.f32.xlu0 %v1769
        %v1771 = vpop.xlane.xlu0 %1770
        %v1772 = vsel %vm1765, %v1714, -inf
        %1773 = vmax.xlane.f32.xlu0 %v1772
        %v1774 = vpop.xlane.xlu0 %1773
        %v1775 = vsel %vm1765, %v1760, -inf
        %1776 = vmax.xlane.f32.xlu0 %v1775
        %v1777 = vpop.xlane.xlu0 %1776
        %v1778 = vsub.f32 %v1622, %v1768
        %v1779 = vsub.f32 %v1668, %v1771
        %v1780 = vsub.f32 %v1714, %v1774
        %v1781 = vsub.f32 %v1760, %v1777
        %v1782 = vmul.f32 %v1778, 1.442695
        %v1783 = vpow.pop %v1782
        %v1784 = vmul.f32 %v1779, 1.442695
        %v1785 = vpow.pop %v1784
        %v1786 = vmul.f32 %v1780, 1.442695
        %v1787 = vpow.pop %v1786
        %v1788 = vmul.f32 %v1781, 1.442695
        %v1789 = vpow.pop %v1788
        %v1790 = vsel %vm1765, %v1783, 0.0
        %1791 = vadd.xlane.f32.xlu0 %v1790
        %v1792 = vpop.xlane.xlu0 %1791
        %v1793 = vsel %vm1765, %v1785, 0.0
        %1794 = vadd.xlane.f32.xlu0 %v1793
        %v1795 = vpop.xlane.xlu0 %1794
        %v1796 = vsel %vm1765, %v1787, 0.0
        %1797 = vadd.xlane.f32.xlu0 %v1796
        %v1798 = vpop.xlane.xlu0 %1797
        %v1799 = vsel %vm1765, %v1789, 0.0
        %1800 = vadd.xlane.f32.xlu0 %v1799
        %v1801 = vpop.xlane.xlu0 %1800
        %v1802 = vrcp.pop %v1792
        %v1803 = vrcp.pop %v1795
        %v1804 = vrcp.pop %v1798
        %v1805 = vrcp.pop %v1801
        %v1806 = vmul.f32 %v1783, %v1802
        %v1807 = vmul.f32 %v1785, %v1803
        %v1808 = vmul.f32 %v1787, %v1804
        %v1809 = vmul.f32 %v1789, %v1805
        %v1810 = vpack.c.bf16 %v1806, %v1806
        %v1811 = vpack.c.bf16 %v1807, %v1807
        %v1812 = vpack.c.bf16 %v1808, %v1808
        %v1813 = vpack.c.bf16 %v1809, %v1809
        %vm1814 = vcmask 60416
        %1815 = vst.msk [vmem:[%s670] sm:$0xf] %vm1814, %v1810
        %1816 = vst.msk [vmem:[%s670 + $0x4] sm:$0xf] %vm1814, %v1811
        %1817 = vst.msk [vmem:[%s670 + $0x8] sm:$0xf] %vm1814, %v1812
        %1818 = vst.msk [vmem:[%s670 + $0xc] sm:$0xf] %vm1814, %v1813
        %v1820 = vsel %vm1765, %v1810, 0
        %vm1822 = vcmask 1043456
        %v1824 = vsel %vm1822, %v1575, 0
        %1826 = vmatprep.subr.bf16.mxu0 0
        %1827 = vmatpush1.bf16.msra.mxu0 %v1824
        %1828 = vmatprep.subr.bf16.mxu0 0
        %1829 = vmatpush1.bf16.msra.mxu0 0
        %1830 = vmatprep.subr.bf16.mxu0 0
        %1831 = vmatpush1.bf16.msra.mxu0 0
        %1832 = vmatprep.subr.bf16.mxu0 0
        %1833 = vmatpush1.bf16.msra.mxu0 0
        %1834 = vmatprep.subr.bf16.mxu0 0
        %1835 = vmatpush1.bf16.msra.mxu0 0
        %1836 = vmatprep.subr.bf16.mxu0 0
        %1837 = vmatpush1.bf16.msra.mxu0 0
        %1838 = vmatprep.subr.bf16.mxu0 0
        %1839 = vmatpush1.bf16.msra.mxu0 0
        %1840 = vmatprep.subr.bf16.mxu0 0
        %1841 = vmatpush1.bf16.msra.mxu0 0
        %1842 = vmatprep.subr.bf16.mxu0 0
        %1843 = vmatpush1.bf16.msra.mxu0 0
        %1844 = vmatprep.subr.bf16.mxu0 0
        %1845 = vmatpush1.bf16.msra.mxu0 0
        %1846 = vmatprep.subr.bf16.mxu0 0
        %1847 = vmatpush1.bf16.msra.mxu0 0
        %1848 = vmatprep.subr.bf16.mxu0 0
        %1849 = vmatpush1.bf16.msra.mxu0 0
        %1850 = vmatprep.subr.bf16.mxu0 0
        %1851 = vmatpush1.bf16.msra.mxu0 0
        %1852 = vmatprep.subr.bf16.mxu0 0
        %1853 = vmatpush1.bf16.msra.mxu0 0
        %1854 = vmatprep.subr.bf16.mxu0 0
        %1855 = vmatpush1.bf16.msra.mxu0 0
        %1856 = vmatprep.subr.bf16.mxu0 0
        %1857 = vmatpush1.bf16.msra.mxu0 0
        %1858 = vmatprep.mubr.bf16.mxu0 0
        %1859 = vmatmul.mubr.bf16.gmra.mrb[0].mxu0 %v1820
        %v1860 = vpop.f32.mrb[0].mxu0
        %v1861 = vadd.f32 0.0, %v1860
        %v1862 = vpop.f32.mrb[0].mxu0
        %v1863 = vpop.f32.mrb[0].mxu0
        %v1864 = vpop.f32.mrb[0].mxu0
        %1865 = vdwg.mxu0
        %v1867 = vsel %vm1765, %v1811, 0
        %v1870 = vsel %vm1822, %v1576, 0
        %1872 = vmatprep.subr.bf16.mxu0 0
        %1873 = vmatpush1.bf16.msra.mxu0 %v1870
        %1874 = vmatprep.subr.bf16.mxu0 0
        %1875 = vmatpush1.bf16.msra.mxu0 0
        %1876 = vmatprep.subr.bf16.mxu0 0
        %1877 = vmatpush1.bf16.msra.mxu0 0
        %1878 = vmatprep.subr.bf16.mxu0 0
        %1879 = vmatpush1.bf16.msra.mxu0 0
        %1880 = vmatprep.subr.bf16.mxu0 0
        %1881 = vmatpush1.bf16.msra.mxu0 0
        %1882 = vmatprep.subr.bf16.mxu0 0
        %1883 = vmatpush1.bf16.msra.mxu0 0
        %1884 = vmatprep.subr.bf16.mxu0 0
        %1885 = vmatpush1.bf16.msra.mxu0 0
        %1886 = vmatprep.subr.bf16.mxu0 0
        %1887 = vmatpush1.bf16.msra.mxu0 0
        %1888 = vmatprep.subr.bf16.mxu0 0
        %1889 = vmatpush1.bf16.msra.mxu0 0
        %1890 = vmatprep.subr.bf16.mxu0 0
        %1891 = vmatpush1.bf16.msra.mxu0 0
        %1892 = vmatprep.subr.bf16.mxu0 0
        %1893 = vmatpush1.bf16.msra.mxu0 0
        %1894 = vmatprep.subr.bf16.mxu0 0
        %1895 = vmatpush1.bf16.msra.mxu0 0
        %1896 = vmatprep.subr.bf16.mxu0 0
        %1897 = vmatpush1.bf16.msra.mxu0 0
        %1898 = vmatprep.subr.bf16.mxu0 0
        %1899 = vmatpush1.bf16.msra.mxu0 0
        %1900 = vmatprep.subr.bf16.mxu0 0
        %1901 = vmatpush1.bf16.msra.mxu0 0
        %1902 = vmatprep.subr.bf16.mxu0 0
        %1903 = vmatpush1.bf16.msra.mxu0 0
        %1904 = vmatprep.mubr.bf16.mxu0 0
        %1905 = vmatmul.mubr.bf16.gmra.mrb[0].mxu0 %v1867
        %v1906 = vpop.f32.mrb[0].mxu0
        %v1907 = vadd.f32 0.0, %v1906
        %v1908 = vpop.f32.mrb[0].mxu0
        %v1909 = vpop.f32.mrb[0].mxu0
        %v1910 = vpop.f32.mrb[0].mxu0
        %1911 = vdwg.mxu0
        %v1913 = vsel %vm1765, %v1812, 0
        %v1916 = vsel %vm1822, %v1577, 0
        %1918 = vmatprep.subr.bf16.mxu0 0
        %1919 = vmatpush1.bf16.msra.mxu0 %v1916
        %1920 = vmatprep.subr.bf16.mxu0 0
        %1921 = vmatpush1.bf16.msra.mxu0 0
        %1922 = vmatprep.subr.bf16.mxu0 0
        %1923 = vmatpush1.bf16.msra.mxu0 0
        %1924 = vmatprep.subr.bf16.mxu0 0
        %1925 = vmatpush1.bf16.msra.mxu0 0
        %1926 = vmatprep.subr.bf16.mxu0 0
        %1927 = vmatpush1.bf16.msra.mxu0 0
        %1928 = vmatprep.subr.bf16.mxu0 0
        %1929 = vmatpush1.bf16.msra.mxu0 0
        %1930 = vmatprep.subr.bf16.mxu0 0
        %1931 = vmatpush1.bf16.msra.mxu0 0
        %1932 = vmatprep.subr.bf16.mxu0 0
        %1933 = vmatpush1.bf16.msra.mxu0 0
        %1934 = vmatprep.subr.bf16.mxu0 0
        %1935 = vmatpush1.bf16.msra.mxu0 0
        %1936 = vmatprep.subr.bf16.mxu0 0
        %1937 = vmatpush1.bf16.msra.mxu0 0
        %1938 = vmatprep.subr.bf16.mxu0 0
        %1939 = vmatpush1.bf16.msra.mxu0 0
        %1940 = vmatprep.subr.bf16.mxu0 0
        %1941 = vmatpush1.bf16.msra.mxu0 0
        %1942 = vmatprep.subr.bf16.mxu0 0
        %1943 = vmatpush1.bf16.msra.mxu0 0
        %1944 = vmatprep.subr.bf16.mxu0 0
        %1945 = vmatpush1.bf16.msra.mxu0 0
        %1946 = vmatprep.subr.bf16.mxu0 0
        %1947 = vmatpush1.bf16.msra.mxu0 0
        %1948 = vmatprep.subr.bf16.mxu0 0
        %1949 = vmatpush1.bf16.msra.mxu0 0
        %1950 = vmatprep.mubr.bf16.mxu0 0
        %1951 = vmatmul.mubr.bf16.gmra.mrb[0].mxu0 %v1913
        %v1952 = vpop.f32.mrb[0].mxu0
        %v1953 = vadd.f32 0.0, %v1952
        %v1954 = vpop.f32.mrb[0].mxu0
        %v1955 = vpop.f32.mrb[0].mxu0
        %v1956 = vpop.f32.mrb[0].mxu0
        %1957 = vdwg.mxu0
        %v1959 = vsel %vm1765, %v1813, 0
        %v1962 = vsel %vm1822, %v1578, 0
        %1964 = vmatprep.subr.bf16.mxu0 0
        %1965 = vmatpush1.bf16.msra.mxu0 %v1962
        %1966 = vmatprep.subr.bf16.mxu0 0
        %1967 = vmatpush1.bf16.msra.mxu0 0
        %1968 = vmatprep.subr.bf16.mxu0 0
        %1969 = vmatpush1.bf16.msra.mxu0 0
        %1970 = vmatprep.subr.bf16.mxu0 0
        %1971 = vmatpush1.bf16.msra.mxu0 0
        %1972 = vmatprep.subr.bf16.mxu0 0
        %1973 = vmatpush1.bf16.msra.mxu0 0
        %1974 = vmatprep.subr.bf16.mxu0 0
        %1975 = vmatpush1.bf16.msra.mxu0 0
        %1976 = vmatprep.subr.bf16.mxu0 0
        %1977 = vmatpush1.bf16.msra.mxu0 0
        %1978 = vmatprep.subr.bf16.mxu0 0
        %1979 = vmatpush1.bf16.msra.mxu0 0
        %1980 = vmatprep.subr.bf16.mxu0 0
        %1981 = vmatpush1.bf16.msra.mxu0 0
        %1982 = vmatprep.subr.bf16.mxu0 0
        %1983 = vmatpush1.bf16.msra.mxu0 0
        %1984 = vmatprep.subr.bf16.mxu0 0
        %1985 = vmatpush1.bf16.msra.mxu0 0
        %1986 = vmatprep.subr.bf16.mxu0 0
        %1987 = vmatpush1.bf16.msra.mxu0 0
        %1988 = vmatprep.subr.bf16.mxu0 0
        %1989 = vmatpush1.bf16.msra.mxu0 0
        %1990 = vmatprep.subr.bf16.mxu0 0
        %1991 = vmatpush1.bf16.msra.mxu0 0
        %1992 = vmatprep.subr.bf16.mxu0 0
        %1993 = vmatpush1.bf16.msra.mxu0 0
        %1994 = vmatprep.subr.bf16.mxu0 0
        %1995 = vmatpush1.bf16.msra.mxu0 0
        %1996 = vmatprep.mubr.bf16.mxu0 0
        %1997 = vmatmul.mubr.bf16.gmra.mrb[0].mxu0 %v1959
        %v1998 = vpop.f32.mrb[0].mxu0
        %v1999 = vadd.f32 0.0, %v1998
        %v2000 = vpop.f32.mrb[0].mxu0
        %v2001 = vpop.f32.mrb[0].mxu0
        %v2002 = vpop.f32.mrb[0].mxu0
        %2003 = vdwg.mxu0
        %v2004 = vcombine.high %v1861, 0.0
        %v2006 = vunpack.c.l.s4 1983009808
        %v2007 = vunpack.c.0.s8 %v2006
        %v2008 = vlaneseq
        %v2009 = vshrl.u32 %v2008, 7
        %v2010 = vsub.s32 %v2007, %v2009
        %v2011 = vrot.slane %v1861, %v2010
        %v2013 = vunpack.c.l.s4 1983009808
        %v2014 = vunpack.c.0.s8 %v2013
        %v2015 = vlaneseq
        %v2016 = vshrl.u32 %v2015, 7
        %v2017 = vsub.s32 %v2014, %v2016
        %v2018 = vrot.slane %v2004, %v2017
        %v2019 = vcombine.high %v1907, 0.0
        %v2021 = vunpack.c.l.s4 1983009808
        %v2022 = vunpack.c.0.s8 %v2021
        %v2023 = vlaneseq
        %v2024 = vshrl.u32 %v2023, 7
        %v2025 = vsub.s32 %v2022, %v2024
        %v2026 = vrot.slane %v1907, %v2025
        %v2028 = vunpack.c.l.s4 1983009808
        %v2029 = vunpack.c.0.s8 %v2028
        %v2030 = vlaneseq
        %v2031 = vshrl.u32 %v2030, 7
        %v2032 = vsub.s32 %v2029, %v2031
        %v2033 = vrot.slane %v2019, %v2032
        %v2034 = vcombine.low %v2011, %v2026
        %v2035 = vcombine.high %v2011, %v2026
        %v2037 = vunpack.c.l.s4 1934713408
        %v2038 = vunpack.c.0.s8 %v2037
        %v2039 = vlaneseq
        %v2040 = vshrl.u32 %v2039, 7
        %v2041 = vsub.s32 %v2038, %v2040
        %v2042 = vrot.slane %v2034, %v2041
        %v2044 = vunpack.c.l.s4 1934713408
        %v2045 = vunpack.c.0.s8 %v2044
        %v2046 = vlaneseq
        %v2047 = vshrl.u32 %v2046, 7
        %v2048 = vsub.s32 %v2045, %v2047
        %v2049 = vrot.slane %v2035, %v2048
        %v2050 = vcombine.low %v2018, %v2033
        %v2051 = vcombine.high %v2018, %v2033
        %v2053 = vunpack.c.l.s4 1934713408
        %v2054 = vunpack.c.0.s8 %v2053
        %v2055 = vlaneseq
        %v2056 = vshrl.u32 %v2055, 7
        %v2057 = vsub.s32 %v2054, %v2056
        %v2058 = vrot.slane %v2050, %v2057
        %v2060 = vunpack.c.l.s4 1934713408
        %v2061 = vunpack.c.0.s8 %v2060
        %v2062 = vlaneseq
        %v2063 = vshrl.u32 %v2062, 7
        %v2064 = vsub.s32 %v2061, %v2063
        %v2065 = vrot.slane %v2051, %v2064
        %v2066 = vcombine.high %v2042, 0.0
        %v2067 = vcombine.high %v2049, 0.0
        %v2068 = vcombine.high %v2058, 0.0
        %v2069 = vcombine.high %v2065, 0.0
        %v2070 = vcombine.high %v1953, 0.0
        %v2072 = vunpack.c.l.s4 1983009808
        %v2073 = vunpack.c.0.s8 %v2072
        %v2074 = vlaneseq
        %v2075 = vshrl.u32 %v2074, 7
        %v2076 = vsub.s32 %v2073, %v2075
        %v2077 = vrot.slane %v1953, %v2076
        %v2079 = vunpack.c.l.s4 1983009808
        %v2080 = vunpack.c.0.s8 %v2079
        %v2081 = vlaneseq
        %v2082 = vshrl.u32 %v2081, 7
        %v2083 = vsub.s32 %v2080, %v2082
        %v2084 = vrot.slane %v2070, %v2083
        %v2085 = vcombine.high %v1999, 0.0
        %v2087 = vunpack.c.l.s4 1983009808
        %v2088 = vunpack.c.0.s8 %v2087
        %v2089 = vlaneseq
        %v2090 = vshrl.u32 %v2089, 7
        %v2091 = vsub.s32 %v2088, %v2090
        %v2092 = vrot.slane %v1999, %v2091
        %v2094 = vunpack.c.l.s4 1983009808
        %v2095 = vunpack.c.0.s8 %v2094
        %v2096 = vlaneseq
        %v2097 = vshrl.u32 %v2096, 7
        %v2098 = vsub.s32 %v2095, %v2097
        %v2099 = vrot.slane %v2085, %v2098
        %v2100 = vcombine.low %v2077, %v2092
        %v2101 = vcombine.high %v2077, %v2092
        %v2103 = vunpack.c.l.s4 1934713408
        %v2104 = vunpack.c.0.s8 %v2103
        %v2105 = vlaneseq
        %v2106 = vshrl.u32 %v2105, 7
        %v2107 = vsub.s32 %v2104, %v2106
        %v2108 = vrot.slane %v2100, %v2107
        %v2110 = vunpack.c.l.s4 1934713408
        %v2111 = vunpack.c.0.s8 %v2110
        %v2112 = vlaneseq
        %v2113 = vshrl.u32 %v2112, 7
        %v2114 = vsub.s32 %v2111, %v2113
        %v2115 = vrot.slane %v2101, %v2114
        %v2116 = vcombine.low %v2084, %v2099
        %v2117 = vcombine.high %v2084, %v2099
        %v2119 = vunpack.c.l.s4 1934713408
        %v2120 = vunpack.c.0.s8 %v2119
        %v2121 = vlaneseq
        %v2122 = vshrl.u32 %v2121, 7
        %v2123 = vsub.s32 %v2120, %v2122
        %v2124 = vrot.slane %v2116, %v2123
        %v2126 = vunpack.c.l.s4 1934713408
        %v2127 = vunpack.c.0.s8 %v2126
        %v2128 = vlaneseq
        %v2129 = vshrl.u32 %v2128, 7
        %v2130 = vsub.s32 %v2127, %v2129
        %v2131 = vrot.slane %v2117, %v2130
        %v2132 = vcombine.high %v2108, 0.0
        %v2133 = vcombine.high %v2115, 0.0
        %v2134 = vcombine.high %v2124, 0.0
        %v2135 = vcombine.high %v2131, 0.0
        %v2136 = vcombine.low %v2042, %v2049
        %v2138 = vunpack.c.l.s4 1983009808
        %v2139 = vunpack.c.0.s8 %v2138
        %v2140 = vlaneseq
        %v2141 = vshrl.u32 %v2140, 7
        %v2142 = vsub.s32 %v2139, %v2141
        %v2143 = vrot.slane %v2136, %v2142
        %v2144 = vcombine.low %v2066, %v2067
        %v2146 = vunpack.c.l.s4 1983009808
        %v2147 = vunpack.c.0.s8 %v2146
        %v2148 = vlaneseq
        %v2149 = vshrl.u32 %v2148, 7
        %v2150 = vsub.s32 %v2147, %v2149
        %v2151 = vrot.slane %v2144, %v2150
        %v2152 = vcombine.low %v2058, %v2065
        %v2154 = vunpack.c.l.s4 1983009808
        %v2155 = vunpack.c.0.s8 %v2154
        %v2156 = vlaneseq
        %v2157 = vshrl.u32 %v2156, 7
        %v2158 = vsub.s32 %v2155, %v2157
        %v2159 = vrot.slane %v2152, %v2158
        %v2160 = vcombine.low %v2068, %v2069
        %v2162 = vunpack.c.l.s4 1983009808
        %v2163 = vunpack.c.0.s8 %v2162
        %v2164 = vlaneseq
        %v2165 = vshrl.u32 %v2164, 7
        %v2166 = vsub.s32 %v2163, %v2165
        %v2167 = vrot.slane %v2160, %v2166
        %v2168 = vcombine.low %v2143, %v2151
        %v2170 = vunpack.c.l.s4 1934713408
        %v2171 = vunpack.c.0.s8 %v2170
        %v2172 = vlaneseq
        %v2173 = vshrl.u32 %v2172, 7
        %v2174 = vsub.s32 %v2171, %v2173
        %v2175 = vrot.slane %v2168, %v2174
        %v2176 = vcombine.low %v2159, %v2167
        %v2178 = vunpack.c.l.s4 1934713408
        %v2179 = vunpack.c.0.s8 %v2178
        %v2180 = vlaneseq
        %v2181 = vshrl.u32 %v2180, 7
        %v2182 = vsub.s32 %v2179, %v2181
        %v2183 = vrot.slane %v2176, %v2182
        %v2184 = vcombine.low %v2175, %v2183
        %v2185 = vcombine.high %v2175, %v2183
        %v2186 = vcombine.low %v2108, %v2115
        %v2188 = vunpack.c.l.s4 1983009808
        %v2189 = vunpack.c.0.s8 %v2188
        %v2190 = vlaneseq
        %v2191 = vshrl.u32 %v2190, 7
        %v2192 = vsub.s32 %v2189, %v2191
        %v2193 = vrot.slane %v2186, %v2192
        %v2194 = vcombine.low %v2132, %v2133
        %v2196 = vunpack.c.l.s4 1983009808
        %v2197 = vunpack.c.0.s8 %v2196
        %v2198 = vlaneseq
        %v2199 = vshrl.u32 %v2198, 7
        %v2200 = vsub.s32 %v2197, %v2199
        %v2201 = vrot.slane %v2194, %v2200
        %v2202 = vcombine.low %v2124, %v2131
        %v2204 = vunpack.c.l.s4 1983009808
        %v2205 = vunpack.c.0.s8 %v2204
        %v2206 = vlaneseq
        %v2207 = vshrl.u32 %v2206, 7
        %v2208 = vsub.s32 %v2205, %v2207
        %v2209 = vrot.slane %v2202, %v2208
        %v2210 = vcombine.low %v2134, %v2135
        %v2212 = vunpack.c.l.s4 1983009808
        %v2213 = vunpack.c.0.s8 %v2212
        %v2214 = vlaneseq
        %v2215 = vshrl.u32 %v2214, 7
        %v2216 = vsub.s32 %v2213, %v2215
        %v2217 = vrot.slane %v2210, %v2216
        %v2218 = vcombine.low %v2193, %v2201
        %v2220 = vunpack.c.l.s4 1934713408
        %v2221 = vunpack.c.0.s8 %v2220
        %v2222 = vlaneseq
        %v2223 = vshrl.u32 %v2222, 7
        %v2224 = vsub.s32 %v2221, %v2223
        %v2225 = vrot.slane %v2218, %v2224
        %v2226 = vcombine.low %v2209, %v2217
        %v2228 = vunpack.c.l.s4 1934713408
        %v2229 = vunpack.c.0.s8 %v2228
        %v2230 = vlaneseq
        %v2231 = vshrl.u32 %v2230, 7
        %v2232 = vsub.s32 %v2229, %v2231
        %v2233 = vrot.slane %v2226, %v2232
        %v2234 = vcombine.low %v2225, %v2233
        %v2235 = vcombine.high %v2225, %v2233
        %2238 = vrot.lane.b32.xlu0 %v2185, 16
        %v2239 = vpop.permute.xlu0 %2238
        %2240 = vrot.lane.b32.xlu0 %v2235, 16
        %v2241 = vpop.permute.xlu0 %2240
        %v2244 = vsel %vm1580, %v2184, %v2239
        %v2245 = vsel %vm1580, %v2234, %v2241
        %v2246 = vpack.c.bf16 %v2245, %v2244
        %v2247 = vld [vmem:[%s692] sm:$0xf]
        %v2248 = vld [vmem:[%s692 + $0x4] sm:$0xf]
        %v2249 = vld [vmem:[%s692 + $0x8] sm:$0xf]
        %v2250 = vld [vmem:[%s692 + $0xc] sm:$0xf]
        %v2251 = vld [vmem:[%s695] sm:$0x1]
        %v2253 = vlaneseq
        %v2254 = vshrl.u32 %v2253, 7
        %v2255 = vsub.s32 0, %v2254
        %v2256 = vrot.slane %v2251, %v2255
        %v2262 = vunpack.c.l.b16 %v2247
        %v2263 = vunpack.c.l.b16 %v2248
        %v2264 = vunpack.c.l.b16 %v2249
        %v2265 = vunpack.c.l.b16 %v2250
        %v2266 = vpack.c.b16 %v2263, %v2262
        %v2267 = vpack.c.b16 %v2265, %v2264
        %v2271 = vsel %vm734, %v2246, 0
        %2273 = vmatprep.subr.bf16.mxu0 0
        %2274 = vmatpush1.bf16.msra.mxu0 %v2266
        %2275 = vmatprep.subr.bf16.mxu0 0
        %2276 = vmatpush1.bf16.msra.mxu0 %v2267
        %2277 = vmatprep.subr.bf16.mxu0 0
        %2278 = vmatpush1.bf16.msra.mxu0 0
        %2279 = vmatprep.subr.bf16.mxu0 0
        %2280 = vmatpush1.bf16.msra.mxu0 0
        %2281 = vmatprep.subr.bf16.mxu0 0
        %2282 = vmatpush1.bf16.msra.mxu0 0
        %2283 = vmatprep.subr.bf16.mxu0 0
        %2284 = vmatpush1.bf16.msra.mxu0 0
        %2285 = vmatprep.subr.bf16.mxu0 0
        %2286 = vmatpush1.bf16.msra.mxu0 0
        %2287 = vmatprep.subr.bf16.mxu0 0
        %2288 = vmatpush1.bf16.msra.mxu0 0
        %2289 = vmatprep.subr.bf16.mxu0 0
        %2290 = vmatpush1.bf16.msra.mxu0 0
        %2291 = vmatprep.subr.bf16.mxu0 0
        %2292 = vmatpush1.bf16.msra.mxu0 0
        %2293 = vmatprep.subr.bf16.mxu0 0
        %2294 = vmatpush1.bf16.msra.mxu0 0
        %2295 = vmatprep.subr.bf16.mxu0 0
        %2296 = vmatpush1.bf16.msra.mxu0 0
        %2297 = vmatprep.subr.bf16.mxu0 0
        %2298 = vmatpush1.bf16.msra.mxu0 0
        %2299 = vmatprep.subr.bf16.mxu0 0
        %2300 = vmatpush1.bf16.msra.mxu0 0
        %2301 = vmatprep.subr.bf16.mxu0 0
        %2302 = vmatpush1.bf16.msra.mxu0 0
        %2303 = vmatprep.subr.bf16.mxu0 0
        %2304 = vmatpush1.bf16.msra.mxu0 0
        %2305 = vmatprep.mubr.bf16.mxu0 0
        %2306 = vmatmul.mubr.bf16.gmra.mrb[0].mxu0 %v2271
        %v2307 = vpop.f32.mrb[0].mxu0
        %v2308 = vadd.f32 %v2256, %v2307
        %v2309 = vpop.f32.mrb[0].mxu0
        %v2310 = vpop.f32.mrb[0].mxu0
        %v2311 = vadd.f32 %v2256, %v2310
        %v2312 = vpop.f32.mrb[0].mxu0
        %2313 = vdwg.mxu0
        %v2314 = vadd.f32 %v730, %v2308
        %v2315 = vadd.f32 %v731, %v2311
        %v2316 = vld [vmem:[%s698] sm:$0x1]
        %v2317 = vld [vmem:[%s701] sm:$0x1]
        %v2318 = vsel %vm734, %v2314, 0.0
        %2319 = vadd.xlane.f32.xlu0 %v2318
        %v2320 = vpop.xlane.xlu0 %2319
        %v2321 = vsel %vm734, %v2315, 0.0
        %2322 = vadd.xlane.f32.xlu0 %v2321
        %v2323 = vpop.xlane.xlu0 %2322
        %v2324 = vmul.f32 %v2320, %v741
        %v2325 = vmul.f32 %v2323, %v741
        %v2326 = vsub.f32 %v2314, %v2324
        %v2327 = vsub.f32 %v2315, %v2325
        %v2328 = vmul.f32 %v2326, %v2326
        %v2329 = vmul.f32 %v2327, %v2327
        %v2330 = vsel %vm734, %v2328, 0.0
        %2331 = vadd.xlane.f32.xlu0 %v2330
        %v2332 = vpop.xlane.xlu0 %2331
        %v2333 = vsel %vm734, %v2329, 0.0
        %2334 = vadd.xlane.f32.xlu0 %v2333
        %v2335 = vpop.xlane.xlu0 %2334
        %v2336 = vmul.f32 %v2332, %v741
        %v2337 = vmul.f32 %v2335, %v741
        %v2338 = vadd.f32 %v2336, 1e-05
        %v2339 = vadd.f32 %v2337, 1e-05
        %v2340 = vrsqrt.pop %v2338
        %v2341 = vrsqrt.pop %v2339
        %v2342 = vmul.f32 %v2326, %v2340
        %v2343 = vmul.f32 %v2327, %v2341
        %v2345 = vlaneseq
        %v2346 = vshrl.u32 %v2345, 7
        %v2347 = vsub.s32 0, %v2346
        %v2348 = vrot.slane %v2316, %v2347
        %v2350 = vmul.f32 %v2342, %v2348
        %v2351 = vmul.f32 %v2343, %v2348
        %v2353 = vlaneseq
        %v2354 = vshrl.u32 %v2353, 7
        %v2355 = vsub.s32 0, %v2354
        %v2356 = vrot.slane %v2317, %v2355
        %v2358 = vadd.f32 %v2350, %v2356
        %v2359 = vadd.f32 %v2351, %v2356
        %v2360 = vpack.c.bf16 %v2359, %v2358
        %v2361 = vld [vmem:[%s706] sm:$0xf]
        %v2362 = vld [vmem:[%s706 + $0x4] sm:$0xf]
        %v2363 = vld [vmem:[%s706 + $0x8] sm:$0xf]
        %v2364 = vld [vmem:[%s706 + $0xc] sm:$0xf]
        %v2365 = vld [vmem:[%s709] sm:$0x1]
        %v2367 = vlaneseq
        %v2368 = vshrl.u32 %v2367, 7
        %v2369 = vsub.s32 0, %v2368
        %v2370 = vrot.slane %v2365, %v2369
        %v2376 = vunpack.c.l.b16 %v2361
        %v2377 = vunpack.c.l.b16 %v2362
        %v2378 = vunpack.c.l.b16 %v2363
        %v2379 = vunpack.c.l.b16 %v2364
        %v2380 = vpack.c.b16 %v2377, %v2376
        %v2381 = vpack.c.b16 %v2379, %v2378
        %v2385 = vsel %vm734, %v2360, 0
        %2387 = vmatprep.subr.bf16.mxu0 0
        %2388 = vmatpush1.bf16.msra.mxu0 %v2380
        %2389 = vmatprep.subr.bf16.mxu0 0
        %2390 = vmatpush1.bf16.msra.mxu0 %v2381
        %2391 = vmatprep.subr.bf16.mxu0 0
        %2392 = vmatpush1.bf16.msra.mxu0 0
        %2393 = vmatprep.subr.bf16.mxu0 0
        %2394 = vmatpush1.bf16.msra.mxu0 0
        %2395 = vmatprep.subr.bf16.mxu0 0
        %2396 = vmatpush1.bf16.msra.mxu0 0
        %2397 = vmatprep.subr.bf16.mxu0 0
        %2398 = vmatpush1.bf16.msra.mxu0 0
        %2399 = vmatprep.subr.bf16.mxu0 0
        %2400 = vmatpush1.bf16.msra.mxu0 0
        %2401 = vmatprep.subr.bf16.mxu0 0
        %2402 = vmatpush1.bf16.msra.mxu0 0
        %2403 = vmatprep.subr.bf16.mxu0 0
        %2404 = vmatpush1.bf16.msra.mxu0 0
        %2405 = vmatprep.subr.bf16.mxu0 0
        %2406 = vmatpush1.bf16.msra.mxu0 0
        %2407 = vmatprep.subr.bf16.mxu0 0
        %2408 = vmatpush1.bf16.msra.mxu0 0
        %2409 = vmatprep.subr.bf16.mxu0 0
        %2410 = vmatpush1.bf16.msra.mxu0 0
        %2411 = vmatprep.subr.bf16.mxu0 0
        %2412 = vmatpush1.bf16.msra.mxu0 0
        %2413 = vmatprep.subr.bf16.mxu0 0
        %2414 = vmatpush1.bf16.msra.mxu0 0
        %2415 = vmatprep.subr.bf16.mxu0 0
        %2416 = vmatpush1.bf16.msra.mxu0 0
        %2417 = vmatprep.subr.bf16.mxu0 0
        %2418 = vmatpush1.bf16.msra.mxu0 0
        %2419 = vmatprep.mubr.bf16.mxu0 0
        %2420 = vmatmul.mubr.bf16.gmra.mrb[0].mxu0 %v2385
        %v2421 = vpop.f32.mrb[0].mxu0
        %v2422 = vadd.f32 %v2370, %v2421
        %v2423 = vpop.f32.mrb[0].mxu0
        %v2424 = vpop.f32.mrb[0].mxu0
        %v2425 = vadd.f32 %v2370, %v2424
        %v2426 = vpop.f32.mrb[0].mxu0
        %2427 = vdwg.mxu0
        %v2428 = vmax.f32 %v2422, 0.0
        %v2429 = vmax.f32 %v2425, 0.0
        %v2430 = vpack.c.bf16 %v2429, %v2428
        %v2431 = vld [vmem:[%s714] sm:$0xf]
        %v2432 = vld [vmem:[%s714 + $0x4] sm:$0xf]
        %v2433 = vld [vmem:[%s714 + $0x8] sm:$0xf]
        %v2434 = vld [vmem:[%s714 + $0xc] sm:$0xf]
        %v2435 = vld [vmem:[%s714 + $0x10] sm:$0xf]
        %v2436 = vld [vmem:[%s714 + $0x14] sm:$0xf]
        %v2437 = vld [vmem:[%s714 + $0x18] sm:$0xf]
        %v2438 = vld [vmem:[%s714 + $0x1c] sm:$0xf]
        %v2439 = vld [vmem:[%s714 + $0x20] sm:$0xf]
        %v2440 = vld [vmem:[%s714 + $0x24] sm:$0xf]
        %v2441 = vld [vmem:[%s714 + $0x28] sm:$0xf]
        %v2442 = vld [vmem:[%s714 + $0x2c] sm:$0xf]
        %v2443 = vld [vmem:[%s714 + $0x30] sm:$0xf]
        %v2444 = vld [vmem:[%s714 + $0x34] sm:$0xf]
        %v2445 = vld [vmem:[%s714 + $0x38] sm:$0xf]
        %v2446 = vld [vmem:[%s714 + $0x3c] sm:$0xf]
        %v2447 = vld [vmem:[%s717] sm:$0x1]
        %v2449 = vlaneseq
        %v2450 = vshrl.u32 %v2449, 7
        %v2451 = vsub.s32 0, %v2450
        %v2452 = vrot.slane %v2447, %v2451
        %v2470 = vunpack.c.l.b16 %v2431
        %v2471 = vunpack.c.l.b16 %v2432
        %v2472 = vunpack.c.l.b16 %v2433
        %v2473 = vunpack.c.l.b16 %v2434
        %v2474 = vunpack.c.l.b16 %v2435
        %v2475 = vunpack.c.l.b16 %v2436
        %v2476 = vunpack.c.l.b16 %v2437
        %v2477 = vunpack.c.l.b16 %v2438
        %v2478 = vunpack.c.l.b16 %v2439
        %v2479 = vunpack.c.l.b16 %v2440
        %v2480 = vunpack.c.l.b16 %v2441
        %v2481 = vunpack.c.l.b16 %v2442
        %v2482 = vunpack.c.l.b16 %v2443
        %v2483 = vunpack.c.l.b16 %v2444
        %v2484 = vunpack.c.l.b16 %v2445
        %v2485 = vunpack.c.l.b16 %v2446
        %v2486 = vpack.c.b16 %v2471, %v2470
        %v2487 = vpack.c.b16 %v2473, %v2472
        %v2488 = vpack.c.b16 %v2475, %v2474
        %v2489 = vpack.c.b16 %v2477, %v2476
        %v2490 = vpack.c.b16 %v2479, %v2478
        %v2491 = vpack.c.b16 %v2481, %v2480
        %v2492 = vpack.c.b16 %v2483, %v2482
        %v2493 = vpack.c.b16 %v2485, %v2484
        %2502 = vmatprep.subr.bf16.mxu0 0
        %2503 = vmatpush1.bf16.msra.mxu0 %v2486
        %2504 = vmatprep.subr.bf16.mxu0 0
        %2505 = vmatpush1.bf16.msra.mxu0 %v2487
        %2506 = vmatprep.subr.bf16.mxu0 0
        %2507 = vmatpush1.bf16.msra.mxu0 %v2488
        %2508 = vmatprep.subr.bf16.mxu0 0
        %2509 = vmatpush1.bf16.msra.mxu0 %v2489
        %2510 = vmatprep.subr.bf16.mxu0 0
        %2511 = vmatpush1.bf16.msra.mxu0 %v2490
        %2512 = vmatprep.subr.bf16.mxu0 0
        %2513 = vmatpush1.bf16.msra.mxu0 %v2491
        %2514 = vmatprep.subr.bf16.mxu0 0
        %2515 = vmatpush1.bf16.msra.mxu0 %v2492
        %2516 = vmatprep.subr.bf16.mxu0 0
        %2517 = vmatpush1.bf16.msra.mxu0 %v2493
        %2518 = vmatprep.subr.bf16.mxu0 0
        %2519 = vmatpush1.bf16.msra.mxu0 0
        %2520 = vmatprep.subr.bf16.mxu0 0
        %2521 = vmatpush1.bf16.msra.mxu0 0
        %2522 = vmatprep.subr.bf16.mxu0 0
        %2523 = vmatpush1.bf16.msra.mxu0 0
        %2524 = vmatprep.subr.bf16.mxu0 0
        %2525 = vmatpush1.bf16.msra.mxu0 0
        %2526 = vmatprep.subr.bf16.mxu0 0
        %2527 = vmatpush1.bf16.msra.mxu0 0
        %2528 = vmatprep.subr.bf16.mxu0 0
        %2529 = vmatpush1.bf16.msra.mxu0 0
        %2530 = vmatprep.subr.bf16.mxu0 0
        %2531 = vmatpush1.bf16.msra.mxu0 0
        %2532 = vmatprep.subr.bf16.mxu0 0
        %2533 = vmatpush1.bf16.msra.mxu0 0
        %2534 = vmatprep.mubr.bf16.mxu0 0
        %2535 = vmatmul.mubr.bf16.gmra.mrb[0].mxu0 %v2430
        %v2536 = vpop.f32.mrb[0].mxu0
        %v2537 = vadd.f32 %v2452, %v2536
        %v2538 = vpop.f32.mrb[0].mxu0
        %v2539 = vpop.f32.mrb[0].mxu0
        %v2540 = vadd.f32 %v2452, %v2539
        %v2541 = vpop.f32.mrb[0].mxu0
        %2542 = vdwg.mxu0
        %v2543 = vadd.f32 %v2314, %v2537
        %v2544 = vadd.f32 %v2315, %v2540
        %2545 = vst.msk [vmem:[#allocation2] sm:$0xff] %vm734, %v2543
        %2546 = vst.msk [vmem:[#allocation2 + $0x8] sm:$0xff] %vm734, %v2544
        %p2547 = scmp.eq.s32.totalorder %s37, 1
        // Predicated region
        $region85: #{tpu_custom_call.1} parent=79 // pred_check
          %p2548 = pneg %p2547
        $region86: #{tpu_custom_call.1} parent=79 // pred_check_branch
          %2550 = sbr.rel (%p2548) target = $region88
        $region87: #{tpu_custom_call.1} parent=79 // pred_region
          %v2551 = vld [vmem:[%s13] sm:$0x1]
          %v2552 = vld [vmem:[%s14] sm:$0x1]
          %v2553 = vsel %vm734, %v2543, 0.0
          %2554 = vadd.xlane.f32.xlu0 %v2553
          %v2555 = vpop.xlane.xlu0 %2554
          %v2556 = vsel %vm734, %v2544, 0.0
          %2557 = vadd.xlane.f32.xlu0 %v2556
          %v2558 = vpop.xlane.xlu0 %2557
          %v2559 = vmul.f32 %v2555, %v741
          %v2560 = vmul.f32 %v2558, %v741
          %v2561 = vsub.f32 %v2543, %v2559
          %v2562 = vsub.f32 %v2544, %v2560
          %v2563 = vmul.f32 %v2561, %v2561
          %v2564 = vmul.f32 %v2562, %v2562
          %v2565 = vsel %vm734, %v2563, 0.0
          %2566 = vadd.xlane.f32.xlu0 %v2565
          %v2567 = vpop.xlane.xlu0 %2566
          %v2568 = vsel %vm734, %v2564, 0.0
          %2569 = vadd.xlane.f32.xlu0 %v2568
          %v2570 = vpop.xlane.xlu0 %2569
          %v2571 = vmul.f32 %v2567, %v741
          %v2572 = vmul.f32 %v2570, %v741
          %v2573 = vadd.f32 %v2571, 1e-05
          %v2574 = vadd.f32 %v2572, 1e-05
          %v2575 = vrsqrt.pop %v2573
          %v2576 = vrsqrt.pop %v2574
          %v2577 = vmul.f32 %v2561, %v2575
          %v2578 = vmul.f32 %v2562, %v2576
          %v2580 = vlaneseq
          %v2581 = vshrl.u32 %v2580, 7
          %v2582 = vsub.s32 0, %v2581
          %v2583 = vrot.slane %v2551, %v2582
          %v2585 = vmul.f32 %v2577, %v2583
          %v2586 = vmul.f32 %v2578, %v2583
          %v2588 = vlaneseq
          %v2589 = vshrl.u32 %v2588, 7
          %v2590 = vsub.s32 0, %v2589
          %v2591 = vrot.slane %v2552, %v2590
          %v2593 = vadd.f32 %v2585, %v2591
          %v2594 = vadd.f32 %v2586, %v2591
          %v2595 = vpack.c.bf16 %v2593, %v2593
          %v2596 = vpack.c.bf16 %v2594, %v2594
          %vm2597 = vcmask 257024
          %2598 = vst.msk [vmem:[#allocation3] sm:$0xf] %vm2597, %v2595
          %2599 = vst.msk [vmem:[#allocation3 + $0x4] sm:$0xf] %vm2597, %v2596
        $region88: #{tpu_custom_call.1} parent=79 // pred_fallthru
          _
        %s2600 = sand.u32 %s455, 1
        %s2601 = scalar_lea.sflag [#allocation6], %s2600
        %s2602 = sand.u32 %s455, 1
        %s2603 = smul.addr %s2602, 16
        %s2604 = scalar_lea.vmem [#allocation5], %s2603
        // Predicated region
        $region89: #{tpu_custom_call.1} parent=79 // pred_check
          %p2605 = pneg %p437
        $region90: #{tpu_custom_call.1} parent=79 // pred_check_branch
          %2607 = sbr.rel (%p2605) target = $region92
        $region91: #{tpu_custom_call.1} parent=79 // pred_region
          %s2608 = smul.u32 2, %s36
          %s2610 = ssub.s32 128, 128
          %2611 = vsyncadd [#allocation4], %s2610
          %s2612 = smul.addr %s2608, 64
          %s2613 = scalar_lea.hbm %s15, %s2612
          %s2614 = sshll.u32 [#allocation3], 4
          %s2615 = int_to_ptr.vmem [resolvable:$true] %s2614
          %2620 = dma.vmem_to_hbm [thread:$0]  %s2615, 128, %s2613, [#allocation4], 64, 64, 4
        $region92: #{tpu_custom_call.1} parent=79 // pred_fallthru
          _
        // Predicated region
        $region93: #{tpu_custom_call.1} parent=79 // pred_check
          %p2621 = pneg %p465
        $region94: #{tpu_custom_call.1} parent=79 // pred_check_branch
          %2623 = sbr.rel (%p2621) target = $region96
        $region95: #{tpu_custom_call.1} parent=79 // pred_region
          %s2624 = smul.u32 2, %s36
          %s2626 = ssub.s32 256, 256
          %2627 = vsyncadd %s2601, %s2626
          %s2628 = smul.addr %s2624, 2
          %s2629 = smul.addr %s37, 4
          %s2630 = sadd.s32 %s2628, %s2629
          %s2631 = smul.addr %s2630, 64
          %s2632 = scalar_lea.hbm %s16, %s2631
          %s2633 = sshll.u32 %s2604, 4
          %s2634 = int_to_ptr.vmem [resolvable:$true] %s2633
          %2639 = dma.vmem_to_hbm [thread:$0]  %s2634, 256, %s2632, %s2601, 64, 64, 4
        $region96: #{tpu_custom_call.1} parent=79 // pred_fallthru
          _
        // Predicated region
        $region97: #{tpu_custom_call.1} parent=79 // pred_check
          %p2640 = pneg %p437
        $region98: #{tpu_custom_call.1} parent=79 // pred_check_branch
          %2642 = sbr.rel (%p2640) target = $region100
        $region99: #{tpu_custom_call.1} parent=79 // pred_region
          %2643 = dma.done [#allocation4], 128
        $region100: #{tpu_custom_call.1} parent=79 // pred_fallthru
          _
      $region80: #{tpu_custom_call.1} parent=5 // pred_fallthru
        _
      %p2644 = scmp.le.s32.totalorder 2, %s27
      // Predicated region
      $region101: #{tpu_custom_call.1} parent=5 // pred_check
        %p2645 = pneg %p2644
      $region102: #{tpu_custom_call.1} parent=5 // pred_check_branch
        %2647 = sbr.rel (%p2645) target = $region104
      $region103: #{tpu_custom_call.1} parent=5 // pred_region
        %s2648 = ssub.s32 %s27, 2
        // Predicated region
        $region105: #{tpu_custom_call.1} parent=103 // pred_check
          %p2649 = pneg %p471
        $region106: #{tpu_custom_call.1} parent=103 // pred_check_branch
          %2651 = sbr.rel (%p2649) target = $region108
        $region107: #{tpu_custom_call.1} parent=103 // pred_region
          %s2652 = sand.u32 %s456, 1
          %s2653 = scalar_lea.sflag [#allocation6], %s2652
          %s2654 = sand.u32 %s456, 1
          %s2655 = smul.addr %s2654, 16
          %s2656 = scalar_lea.vmem [#allocation5], %s2655
          %2657 = dma.done %s2653, 256
        $region108: #{tpu_custom_call.1} parent=103 // pred_fallthru
          _
      $region104: #{tpu_custom_call.1} parent=5 // pred_fallthru
        _
    $region6: #{tpu_custom_call.1} parent=1 // loop_footer
      %s31 = sadd.s32 1, %s27
    $region7: #{tpu_custom_call.1} parent=1 // loop_footer_branch
      %26 = sbr.rel target = $region3
    $region8: #{tpu_custom_call.1} parent=1 // loop_exit
      _
    %2658 = vsyncpa [#allocation4], 1
    %s2659 = scalar_lea.sflag [#allocation4], 1
    %2660 = vsyncpa %s2659, 1
    %2661 = vsyncpa [#allocation6], 1
    %s2662 = scalar_lea.sflag [#allocation6], 1
    %2663 = vsyncpa %s2662, 1

</llo_original>
